<compile_context>
chip_gen: v7x
topology: tpu7x:2x2x1
jax: 0.10.0
libtpu: 0.0.40
codegen_flags: <defaults>
</compile_context>

<pallas_src>
import functools
import math

import jax
import jax.numpy as jnp
from jax.experimental import pallas as pl
from jax.experimental.pallas import tpu as pltpu


def _mha_kernel(q_ref, k_ref, v_ref,
                wqt_ref, bq_ref, wkt_ref, bk_ref, wvt_ref, bv_ref,
                wot_ref, bo_ref,
                *out_refs, num_heads, need_weights):
    if need_weights:
        out_ref, attn_ref = out_refs
    else:
        (out_ref,) = out_refs
        attn_ref = None

    Bb, M, Cq = q_ref.shape
    _, N, Ck = k_ref.shape
    _, _, Cv = v_ref.shape
    E = wqt_ref.shape[1]
    H = num_heads
    d = E // H
    cdt = wqt_ref.dtype            # matmul compute dtype (bf16)

    # --- Q/K/V projections: one full-width matmul per tensor over the whole
    # (Bb*seq) block. Weights are pre-transposed (and Q pre-scaled by 1/sqrt(d))
    # in the wrapper, so the kernel does plain x @ W with f32 accumulation.
    q2 = q_ref[...].reshape(Bb * M, Cq)
    k2 = k_ref[...].reshape(Bb * N, Ck)
    v2 = v_ref[...].reshape(Bb * N, Cv)
    qp = (jnp.dot(q2, wqt_ref[...], preferred_element_type=jnp.float32)
          + bq_ref[...]).reshape(Bb, M, E)
    kp = (jnp.dot(k2, wkt_ref[...], preferred_element_type=jnp.float32)
          + bk_ref[...]).reshape(Bb, N, E)
    vp = (jnp.dot(v2, wvt_ref[...], preferred_element_type=jnp.float32)
          + bv_ref[...]).reshape(Bb, N, E)

    qp_c = qp.astype(cdt)
    kp_c = kp.astype(cdt)
    vp_c = vp.astype(cdt)

    # --- Head-batched operands: (G, seq, d) with G = H*Bb (head-major order).
    # Built from proven-to-lower ops: lane slicing + leading-axis concatenate.
    qh = jnp.concatenate([qp_c[:, :, h * d:(h + 1) * d] for h in range(H)], axis=0)
    kh = jnp.concatenate([kp_c[:, :, h * d:(h + 1) * d] for h in range(H)], axis=0)
    vh = jnp.concatenate([vp_c[:, :, h * d:(h + 1) * d] for h in range(H)], axis=0)

    # --- All heads in one batched QK^T / softmax / PV.
    s = jnp.einsum('gmd,gnd->gmn', qh, kh,
                   preferred_element_type=jnp.float32)        # (G, M, N) f32
    mx = jnp.max(s, axis=-1, keepdims=True)
    e = jnp.exp(s - mx)
    denom = jnp.sum(e, axis=-1, keepdims=True)
    # Unnormalized PV, normalize afterwards on the (G, M, d) result (N/d x less VALU).
    ctx_un = jnp.einsum('gmn,gnd->gmd', e.astype(cdt), vh,
                        preferred_element_type=jnp.float32)   # (G, M, d) f32

    if need_weights:
        inv = 1.0 / denom                       # exact: exported rows sum to ~1
    else:
        inv = pl.reciprocal(denom, approx=True)  # EUP slot, nearly free
    ctx = ctx_un * inv                          # (G, M, d)

    # --- Reassemble the (Bb, M, E) context slab (single lane concatenate) and
    # run the output projection as one (Bb*M, E) x (E, E) matmul.
    ctx_cat = jnp.concatenate(
        [ctx[h * Bb:(h + 1) * Bb] for h in range(H)], axis=-1)   # (Bb, M, E)
    ctx2 = ctx_cat.astype(cdt).reshape(Bb * M, E)
    out = (jnp.dot(ctx2, wot_ref[...], preferred_element_type=jnp.float32)
           + bo_ref[...])
    out_ref[...] = out.reshape(Bb, M, E).astype(out_ref.dtype)

    if need_weights:
        w = e * inv                                              # normalized, all heads
        w_mean = jnp.mean(w.reshape(H, Bb, M, N), axis=0)        # head average
        attn_ref[...] = w_mean.astype(attn_ref.dtype)


def _pad(x, m):
    return ((x + m - 1) // m) * m


def multihead_attention(query, key, value, params, num_heads,
                        need_weights=True, block_b=None,
                        compute_dtype=jnp.bfloat16):
    """query/key/value: (M, B, Cq), (N, B, Ck), (N, B, Cv)  -- batch_first=False."""
    result_dtype = query.dtype

    # batch-first layout for the kernel (matches the module's internal transpose)
    q = jnp.transpose(query, (1, 0, 2))
    k = jnp.transpose(key, (1, 0, 2))
    v = jnp.transpose(value, (1, 0, 2))
    B, M, Cq = q.shape
    _, N, Ck = k.shape
    _, _, Cv = v.shape
    E = params["wq"].shape[0]
    d = E // num_heads
    scale = 1.0 / math.sqrt(d)

    # Layout plumbing done ONCE outside the kernel:
    #   - pre-transpose all projection weights (kernel does x @ W, no XLU .T)
    #   - fold the 1/sqrt(d) softmax scale into the Q projection (weight + bias)
    #   - bf16 matmul operands, f32 biases / accumulation
    wqt = (params["wq"] * scale).T.astype(compute_dtype)     # (Cq, E)
    bq = (params["bq"] * scale).astype(jnp.float32)          # (1, E)
    wkt = params["wk"].T.astype(compute_dtype)               # (Ck, E)
    bk = params["bk"].astype(jnp.float32)
    wvt = params["wv"].T.astype(compute_dtype)               # (Cv, E)
    bv = params["bv"].astype(jnp.float32)
    wot = params["wo"].T.astype(compute_dtype)               # (E, E)
    bo = params["bo"].astype(jnp.float32)

    q = q.astype(compute_dtype)
    k = k.astype(compute_dtype)
    v = v.astype(compute_dtype)

    # --- VMEM budget: ~75% of per-core capacity (~48 MiB on v7x, ~96 MiB on v5e/v6e).
    try:
        vmem_cap = int(pltpu.get_tpu_info().vmem_capacity_bytes)
    except Exception:
        vmem_cap = 64 * 1024 * 1024            # conservative (v7x per-TC physical)
    budget = int(vmem_cap * 0.75)

    csize = jnp.dtype(compute_dtype).itemsize
    f32 = 4
    lane = lambda x: _pad(x, 128)
    sub = lambda x: _pad(x, 8)

    # Fixed footprint: projection weights + biases (double-buffered by the pipeline).
    w_bytes = (sub(Cq) + sub(Ck) + sub(Cv) + sub(E)) * lane(E) * csize \
        + 4 * 8 * lane(E) * f32
    fixed = 2 * w_bytes + 2 * 1024 * 1024      # + safety margin

    # Per-batch-element footprint (lane/sublane padded):
    io = 2 * (sub(M) * lane(Cq) + sub(N) * lane(Ck) + sub(N) * lane(Cv)) * csize
    io += 2 * sub(M) * lane(E) * csize                      # out block (double-buffered)
    if need_weights:
        io += 2 * sub(M) * lane(N) * csize                  # attn block (double-buffered)
    tmp = (sub(M) + 2 * sub(N)) * lane(E) * (f32 + csize)   # qp/kp/vp + bf16 copies
    tmp += num_heads * sub(M) * lane(N) * (2 * f32 + csize)  # s, e (f32) + e in bf16
    tmp += num_heads * sub(M) * lane(d) * (2 * f32 + csize)  # ctx_un, ctx, bf16 heads
    tmp += sub(M) * lane(E) * (f32 + csize)                  # ctx slab / out
    per_elem = io + int(1.25 * tmp)

    if block_b is None:
        # Keep >=4 "parallel" grid steps (2 per v7x TensorCore) when B allows it,
        # and stay inside the budget; otherwise fall back to block_b=1.
        min_steps = min(B, 4)
        block_b = 1
        for cand in range(B, 0, -1):
            if B % cand:
                continue
            if B // cand < min_steps:
                continue
            if fixed + cand * per_elem > budget:
                continue
            block_b = cand
            break
    assert B % block_b == 0
    grid = (B // block_b,)

    def wspec(shape):
        return pl.BlockSpec(shape, lambda b: (0,) * len(shape))

    in_specs = [
        pl.BlockSpec((block_b, M, Cq), lambda b: (b, 0, 0)),
        pl.BlockSpec((block_b, N, Ck), lambda b: (b, 0, 0)),
        pl.BlockSpec((block_b, N, Cv), lambda b: (b, 0, 0)),
        wspec((Cq, E)), wspec((1, E)),
        wspec((Ck, E)), wspec((1, E)),
        wspec((Cv, E)), wspec((1, E)),
        wspec((E, E)), wspec((1, E)),
    ]

    # Kernel outputs in bf16 (halves HBM writeback); wrapper casts back below.
    out_shape = [jax.ShapeDtypeStruct((B, M, E), compute_dtype)]
    out_specs = [pl.BlockSpec((block_b, M, E), lambda b: (b, 0, 0))]
    if need_weights:
        # NOTE: the (B, M, N) attention output dominates writeback for large M, N;
        # prefer need_weights=False on the hot path.
        out_shape.append(jax.ShapeDtypeStruct((B, M, N), compute_dtype))
        out_specs.append(pl.BlockSpec((block_b, M, N), lambda b: (b, 0, 0)))

    kernel = functools.partial(_mha_kernel, num_heads=num_heads,
                               need_weights=need_weights)
    results = pl.pallas_call(
        kernel,
        out_shape=tuple(out_shape),
        grid=grid,
        in_specs=in_specs,
        out_specs=tuple(out_specs),
        compiler_params=pltpu.CompilerParams(
            dimension_semantics=("parallel",),
            vmem_limit_bytes=budget),
    )(q, k, v, wqt, bq, wkt, bk, wvt, bv, wot, bo)

    if need_weights:
        out, attn = results
        attn = attn.astype(result_dtype)
    else:
        (out,) = results
        attn = None

    # result_permute in the reference is identity for 3-D tensors; undo the
    # batch_first transpose so the output is (M, B, E) like the PyTorch module.
    # The dtype cast fuses with this transpose.
    out = jnp.transpose(out, (1, 0, 2)).astype(result_dtype)
    return out, attn                  # attn: (B, M, N), averaged over heads (or None)


def _linear_init(key, out_dim, in_dim):
    # deterministic init mimicking nn.Linear's uniform(-1/sqrt(fan_in), ...)
    kw, kb = jax.random.split(key)
    bound = 1.0 / math.sqrt(in_dim)
    w = jax.random.uniform(kw, (out_dim, in_dim), jnp.float32, -bound, bound)
    b = jax.random.uniform(kb, (1, out_dim), jnp.float32, -bound, bound)
    return w, b


def _reference(query, key, value, params, num_heads):
    """Pure-JAX f32 reference of the PyTorch forward (batch_first=False, 3-D)."""
    q = jnp.transpose(query, (1, 0, 2))
    k = jnp.transpose(key, (1, 0, 2))
    v = jnp.transpose(value, (1, 0, 2))
    qp = q @ params["wq"].T + params["bq"][0]
    kp = k @ params["wk"].T + params["bk"][0]
    vp = v @ params["wv"].T + params["bv"][0]
    E = qp.shape[-1]
    d = E // num_heads
    outs, wsum = [], None
    for h in range(num_heads):
        qs, ks, vs = (qp[..., h*d:(h+1)*d], kp[..., h*d:(h+1)*d], vp[..., h*d:(h+1)*d])
        w = jax.nn.softmax(jnp.einsum("bmd,bnd->bmn", qs, ks) / math.sqrt(d), axis=-1)
        outs.append(jnp.einsum("bmn,bnd->bmd", w, vs))
        wsum = w if wsum is None else wsum + w
    res = jnp.concatenate(outs, -1) @ params["wo"].T + params["bo"][0]
    return jnp.transpose(res, (1, 0, 2)), wsum / num_heads


if __name__ == "__main__":
    embed_dim, num_heads = 32, 4
    M, N, B = 16, 16, 4
    qdim = kdim = vdim = embed_dim

    root = jax.random.PRNGKey(0)
    k_q, k_k, k_v, k_wq, k_wk, k_wv, k_wo = jax.random.split(root, 7)

    wq, bq = _linear_init(k_wq, embed_dim, qdim)
    wk, bk = _linear_init(k_wk, embed_dim, kdim)
    wv, bv = _linear_init(k_wv, embed_dim, vdim)
    wo, bo = _linear_init(k_wo, embed_dim, embed_dim)
    params = dict(wq=wq, bq=bq, wk=wk, bk=bk, wv=wv, bv=bv, wo=wo, bo=bo)

    # batch_first=False inputs: (seq, B, C)
    query = jax.random.normal(k_q, (M, B, qdim), jnp.float32)
    key = jax.random.normal(k_k, (N, B, kdim), jnp.float32)
    value = jax.random.normal(k_v, (N, B, vdim), jnp.float32)

    out, attn = multihead_attention(query, key, value, params, num_heads)
    out = jax.block_until_ready(out)
    attn = jax.block_until_ready(attn)

    ref_out, ref_attn = _reference(query, key, value, params, num_heads)
    assert out.shape == (M, B, embed_dim) and attn.shape == (B, M, N)
    # bf16 matmul operands + bf16 output rounding (f32 accumulation) -> relaxed tol.
    assert jnp.allclose(out, ref_out, atol=5e-2, rtol=5e-2)
    assert jnp.allclose(attn, ref_attn, atol=5e-2, rtol=5e-2)

    # need_weights=False variant (skips the (B, M, N) attention-weight writeback
    # and uses the approximate-reciprocal fast path for softmax normalization).
    out_nw, attn_nw = multihead_attention(query, key, value, params, num_heads,
                                          need_weights=False)
    out_nw = jax.block_until_ready(out_nw)
    assert attn_nw is None
    assert jnp.allclose(out_nw, ref_out, atol=5e-2, rtol=5e-2)

    print("KERNEL_OK")
</pallas_src>

<mosaic_0001>
module attributes {stable_mosaic.version = 11 : i64} {
  func.func @_mha_kernel(%arg0: i32, %arg1: memref<1x16x32xbf16, #tpu.memory_space<vmem>>, %arg2: memref<1x16x32xbf16, #tpu.memory_space<vmem>>, %arg3: memref<1x16x32xbf16, #tpu.memory_space<vmem>>, %arg4: memref<32x32xbf16, #tpu.memory_space<vmem>>, %arg5: memref<1x32xf32, #tpu.memory_space<vmem>>, %arg6: memref<32x32xbf16, #tpu.memory_space<vmem>>, %arg7: memref<1x32xf32, #tpu.memory_space<vmem>>, %arg8: memref<32x32xbf16, #tpu.memory_space<vmem>>, %arg9: memref<1x32xf32, #tpu.memory_space<vmem>>, %arg10: memref<32x32xbf16, #tpu.memory_space<vmem>>, %arg11: memref<1x32xf32, #tpu.memory_space<vmem>>, %arg12: memref<1x16x32xbf16, #tpu.memory_space<vmem>>, %arg13: memref<1x16x16xbf16, #tpu.memory_space<vmem>>) attributes {dimension_semantics = [#tpu.dimension_semantics<parallel>], iteration_bounds = array<i64: 4>, scalar_prefetch = 0 : i64, scratch_operands = 0 : i64, tpu.core_type = #tpu.core_type<tc>, window_params = [{transform_indices = @transform_0, window_bounds = array<i64: 1, 16, 32>}, {transform_indices = @transform_1, window_bounds = array<i64: 1, 16, 32>}, {transform_indices = @transform_2, window_bounds = array<i64: 1, 16, 32>}, {pipeline_mode = #tpu.pipeline_mode<synchronous>, transform_indices = @transform_3, window_bounds = array<i64: 32, 32>}, {pipeline_mode = #tpu.pipeline_mode<synchronous>, transform_indices = @transform_4, window_bounds = array<i64: 1, 32>}, {pipeline_mode = #tpu.pipeline_mode<synchronous>, transform_indices = @transform_5, window_bounds = array<i64: 32, 32>}, {pipeline_mode = #tpu.pipeline_mode<synchronous>, transform_indices = @transform_6, window_bounds = array<i64: 1, 32>}, {pipeline_mode = #tpu.pipeline_mode<synchronous>, transform_indices = @transform_7, window_bounds = array<i64: 32, 32>}, {pipeline_mode = #tpu.pipeline_mode<synchronous>, transform_indices = @transform_8, window_bounds = array<i64: 1, 32>}, {pipeline_mode = #tpu.pipeline_mode<synchronous>, transform_indices = @transform_9, window_bounds = array<i64: 32, 32>}, {pipeline_mode = #tpu.pipeline_mode<synchronous>, transform_indices = @transform_10, window_bounds = array<i64: 1, 32>}, {transform_indices = @transform_11, window_bounds = array<i64: 1, 16, 32>}, {transform_indices = @transform_12, window_bounds = array<i64: 1, 16, 16>}]} {
    %c0 = arith.constant 0 : index
    %c0_0 = arith.constant 0 : index
    %c0_1 = arith.constant 0 : index
    %0 = vector.load %arg1[%c0, %c0_0, %c0_1] : memref<1x16x32xbf16, #tpu.memory_space<vmem>>, vector<1x16x32xbf16>
    %1 = vector.shape_cast %0 : vector<1x16x32xbf16> to vector<16x32xbf16>
    %c0_2 = arith.constant 0 : index
    %c0_3 = arith.constant 0 : index
    %c0_4 = arith.constant 0 : index
    %2 = vector.load %arg2[%c0_2, %c0_3, %c0_4] : memref<1x16x32xbf16, #tpu.memory_space<vmem>>, vector<1x16x32xbf16>
    %3 = vector.shape_cast %2 : vector<1x16x32xbf16> to vector<16x32xbf16>
    %c0_5 = arith.constant 0 : index
    %c0_6 = arith.constant 0 : index
    %c0_7 = arith.constant 0 : index
    %4 = vector.load %arg3[%c0_5, %c0_6, %c0_7] : memref<1x16x32xbf16, #tpu.memory_space<vmem>>, vector<1x16x32xbf16>
    %5 = vector.shape_cast %4 : vector<1x16x32xbf16> to vector<16x32xbf16>
    %c0_8 = arith.constant 0 : index
    %c0_9 = arith.constant 0 : index
    %6 = vector.load %arg4[%c0_8, %c0_9] : memref<32x32xbf16, #tpu.memory_space<vmem>>, vector<32x32xbf16>
    %cst = arith.constant dense<0.000000e+00> : vector<16x32xf32>
    %7 = tpu.matmul %1, %6, %cst {dimension_numbers = #tpu.dot_dimension_numbers<[1], [0], [0], [1], [0, 0, 1, 1], [], []>} : vector<16x32xbf16>, vector<32x32xbf16>, vector<16x32xf32> -> vector<16x32xf32>
    %c0_10 = arith.constant 0 : index
    %c0_11 = arith.constant 0 : index
    %8 = vector.load %arg5[%c0_10, %c0_11] : memref<1x32xf32, #tpu.memory_space<vmem>>, vector<1x32xf32>
    %9 = vector.broadcast %8 : vector<1x32xf32> to vector<16x32xf32>
    %10 = arith.addf %7, %9 : vector<16x32xf32>
    %11 = vector.shape_cast %10 : vector<16x32xf32> to vector<1x16x32xf32>
    %c0_12 = arith.constant 0 : index
    %c0_13 = arith.constant 0 : index
    %12 = vector.load %arg6[%c0_12, %c0_13] : memref<32x32xbf16, #tpu.memory_space<vmem>>, vector<32x32xbf16>
    %cst_14 = arith.constant dense<0.000000e+00> : vector<16x32xf32>
    %13 = tpu.matmul %3, %12, %cst_14 {dimension_numbers = #tpu.dot_dimension_numbers<[1], [0], [0], [1], [0, 0, 1, 1], [], []>} : vector<16x32xbf16>, vector<32x32xbf16>, vector<16x32xf32> -> vector<16x32xf32>
    %c0_15 = arith.constant 0 : index
    %c0_16 = arith.constant 0 : index
    %14 = vector.load %arg7[%c0_15, %c0_16] : memref<1x32xf32, #tpu.memory_space<vmem>>, vector<1x32xf32>
    %15 = vector.broadcast %14 : vector<1x32xf32> to vector<16x32xf32>
    %16 = arith.addf %13, %15 : vector<16x32xf32>
    %17 = vector.shape_cast %16 : vector<16x32xf32> to vector<1x16x32xf32>
    %c0_17 = arith.constant 0 : index
    %c0_18 = arith.constant 0 : index
    %18 = vector.load %arg8[%c0_17, %c0_18] : memref<32x32xbf16, #tpu.memory_space<vmem>>, vector<32x32xbf16>
    %cst_19 = arith.constant dense<0.000000e+00> : vector<16x32xf32>
    %19 = tpu.matmul %5, %18, %cst_19 {dimension_numbers = #tpu.dot_dimension_numbers<[1], [0], [0], [1], [0, 0, 1, 1], [], []>} : vector<16x32xbf16>, vector<32x32xbf16>, vector<16x32xf32> -> vector<16x32xf32>
    %c0_20 = arith.constant 0 : index
    %c0_21 = arith.constant 0 : index
    %20 = vector.load %arg9[%c0_20, %c0_21] : memref<1x32xf32, #tpu.memory_space<vmem>>, vector<1x32xf32>
    %21 = vector.broadcast %20 : vector<1x32xf32> to vector<16x32xf32>
    %22 = arith.addf %19, %21 : vector<16x32xf32>
    %23 = vector.shape_cast %22 : vector<16x32xf32> to vector<1x16x32xf32>
    %24 = arith.truncf %11 : vector<1x16x32xf32> to vector<1x16x32xbf16>
    %25 = arith.truncf %17 : vector<1x16x32xf32> to vector<1x16x32xbf16>
    %26 = arith.truncf %23 : vector<1x16x32xf32> to vector<1x16x32xbf16>
    %27 = vector.extract_strided_slice %24 {offsets = [0, 0, 0], sizes = [1, 16, 8], strides = [1, 1, 1]} : vector<1x16x32xbf16> to vector<1x16x8xbf16>
    %28 = vector.extract_strided_slice %24 {offsets = [0, 0, 8], sizes = [1, 16, 8], strides = [1, 1, 1]} : vector<1x16x32xbf16> to vector<1x16x8xbf16>
    %29 = vector.extract_strided_slice %24 {offsets = [0, 0, 16], sizes = [1, 16, 8], strides = [1, 1, 1]} : vector<1x16x32xbf16> to vector<1x16x8xbf16>
    %30 = vector.extract_strided_slice %24 {offsets = [0, 0, 24], sizes = [1, 16, 8], strides = [1, 1, 1]} : vector<1x16x32xbf16> to vector<1x16x8xbf16>
    %31 = tpu.concatenate %27, %28, %29, %30 in 0 : vector<1x16x8xbf16>, vector<1x16x8xbf16>, vector<1x16x8xbf16>, vector<1x16x8xbf16> -> vector<4x16x8xbf16>
    %32 = vector.extract_strided_slice %25 {offsets = [0, 0, 0], sizes = [1, 16, 8], strides = [1, 1, 1]} : vector<1x16x32xbf16> to vector<1x16x8xbf16>
    %33 = vector.extract_strided_slice %25 {offsets = [0, 0, 8], sizes = [1, 16, 8], strides = [1, 1, 1]} : vector<1x16x32xbf16> to vector<1x16x8xbf16>
    %34 = vector.extract_strided_slice %25 {offsets = [0, 0, 16], sizes = [1, 16, 8], strides = [1, 1, 1]} : vector<1x16x32xbf16> to vector<1x16x8xbf16>
    %35 = vector.extract_strided_slice %25 {offsets = [0, 0, 24], sizes = [1, 16, 8], strides = [1, 1, 1]} : vector<1x16x32xbf16> to vector<1x16x8xbf16>
    %36 = tpu.concatenate %32, %33, %34, %35 in 0 : vector<1x16x8xbf16>, vector<1x16x8xbf16>, vector<1x16x8xbf16>, vector<1x16x8xbf16> -> vector<4x16x8xbf16>
    %37 = vector.extract_strided_slice %26 {offsets = [0, 0, 0], sizes = [1, 16, 8], strides = [1, 1, 1]} : vector<1x16x32xbf16> to vector<1x16x8xbf16>
    %38 = vector.extract_strided_slice %26 {offsets = [0, 0, 8], sizes = [1, 16, 8], strides = [1, 1, 1]} : vector<1x16x32xbf16> to vector<1x16x8xbf16>
    %39 = vector.extract_strided_slice %26 {offsets = [0, 0, 16], sizes = [1, 16, 8], strides = [1, 1, 1]} : vector<1x16x32xbf16> to vector<1x16x8xbf16>
    %40 = vector.extract_strided_slice %26 {offsets = [0, 0, 24], sizes = [1, 16, 8], strides = [1, 1, 1]} : vector<1x16x32xbf16> to vector<1x16x8xbf16>
    %41 = tpu.concatenate %37, %38, %39, %40 in 0 : vector<1x16x8xbf16>, vector<1x16x8xbf16>, vector<1x16x8xbf16>, vector<1x16x8xbf16> -> vector<4x16x8xbf16>
    "tpu.trace_start"() <{level = 10 : i32, message = "gmd,gnd->gmn"}> : () -> ()
    %cst_22 = arith.constant dense<0.000000e+00> : vector<4x16x16xf32>
    %42 = tpu.matmul %31, %36, %cst_22 {dimension_numbers = #tpu.dot_dimension_numbers<[2], [2], [1], [1], [0, 0, 0, 1, 1, 1], [0], [0]>} : vector<4x16x8xbf16>, vector<4x16x8xbf16>, vector<4x16x16xf32> -> vector<4x16x16xf32>
    "tpu.trace_stop"() : () -> ()
    %cst_23 = arith.constant dense<0xFF800000> : vector<4x16xf32>
    %43 = vector.multi_reduction <maximumf>, %42, %cst_23 [2] : vector<4x16x16xf32> to vector<4x16xf32>
    %44 = vector.shape_cast %43 : vector<4x16xf32> to vector<4x16x1xf32>
    %45 = vector.broadcast %44 : vector<4x16x1xf32> to vector<4x16x16xf32>
    %46 = arith.subf %42, %45 : vector<4x16x16xf32>
    %47 = math.exp %46 : vector<4x16x16xf32>
    %cst_24 = arith.constant dense<0.000000e+00> : vector<4x16xf32>
    %48 = vector.multi_reduction <add>, %47, %cst_24 [2] : vector<4x16x16xf32> to vector<4x16xf32>
    %49 = vector.shape_cast %48 : vector<4x16xf32> to vector<4x16x1xf32>
    %50 = arith.truncf %47 : vector<4x16x16xf32> to vector<4x16x16xbf16>
    "tpu.trace_start"() <{level = 10 : i32, message = "gmn,gnd->gmd"}> : () -> ()
    %cst_25 = arith.constant dense<0.000000e+00> : vector<4x16x8xf32>
    %51 = tpu.matmul %50, %41, %cst_25 {dimension_numbers = #tpu.dot_dimension_numbers<[2], [1], [1], [2], [0, 0, 0, 1, 1, 2], [0], [0]>} : vector<4x16x16xbf16>, vector<4x16x8xbf16>, vector<4x16x8xf32> -> vector<4x16x8xf32>
    "tpu.trace_stop"() : () -> ()
    %cst_26 = arith.constant 1.000000e+00 : f32
    %52 = vector.broadcast %cst_26 : f32 to vector<4x16x1xf32>
    %53 = arith.divf %52, %49 : vector<4x16x1xf32>
    %54 = vector.broadcast %53 : vector<4x16x1xf32> to vector<4x16x8xf32>
    %55 = arith.mulf %51, %54 : vector<4x16x8xf32>
    %56 = vector.extract_strided_slice %55 {offsets = [0, 0, 0], sizes = [1, 16, 8], strides = [1, 1, 1]} : vector<4x16x8xf32> to vector<1x16x8xf32>
    %57 = vector.extract_strided_slice %55 {offsets = [1, 0, 0], sizes = [1, 16, 8], strides = [1, 1, 1]} : vector<4x16x8xf32> to vector<1x16x8xf32>
    %58 = vector.extract_strided_slice %55 {offsets = [2, 0, 0], sizes = [1, 16, 8], strides = [1, 1, 1]} : vector<4x16x8xf32> to vector<1x16x8xf32>
    %59 = vector.extract_strided_slice %55 {offsets = [3, 0, 0], sizes = [1, 16, 8], strides = [1, 1, 1]} : vector<4x16x8xf32> to vector<1x16x8xf32>
    %60 = tpu.concatenate %56, %57, %58, %59 in 2 : vector<1x16x8xf32>, vector<1x16x8xf32>, vector<1x16x8xf32>, vector<1x16x8xf32> -> vector<1x16x32xf32>
    %61 = arith.truncf %60 : vector<1x16x32xf32> to vector<1x16x32xbf16>
    %62 = vector.shape_cast %61 : vector<1x16x32xbf16> to vector<16x32xbf16>
    %c0_27 = arith.constant 0 : index
    %c0_28 = arith.constant 0 : index
    %63 = vector.load %arg10[%c0_27, %c0_28] : memref<32x32xbf16, #tpu.memory_space<vmem>>, vector<32x32xbf16>
    %cst_29 = arith.constant dense<0.000000e+00> : vector<16x32xf32>
    %64 = tpu.matmul %62, %63, %cst_29 {dimension_numbers = #tpu.dot_dimension_numbers<[1], [0], [0], [1], [0, 0, 1, 1], [], []>} : vector<16x32xbf16>, vector<32x32xbf16>, vector<16x32xf32> -> vector<16x32xf32>
    %c0_30 = arith.constant 0 : index
    %c0_31 = arith.constant 0 : index
    %65 = vector.load %arg11[%c0_30, %c0_31] : memref<1x32xf32, #tpu.memory_space<vmem>>, vector<1x32xf32>
    %66 = vector.broadcast %65 : vector<1x32xf32> to vector<16x32xf32>
    %67 = arith.addf %64, %66 : vector<16x32xf32>
    %68 = vector.shape_cast %67 : vector<16x32xf32> to vector<1x16x32xf32>
    %69 = arith.truncf %68 : vector<1x16x32xf32> to vector<1x16x32xbf16>
    %c0_32 = arith.constant 0 : index
    %c0_33 = arith.constant 0 : index
    %c0_34 = arith.constant 0 : index
    %70 = vector.load %arg12[%c0_32, %c0_33, %c0_34] : memref<1x16x32xbf16, #tpu.memory_space<vmem>>, vector<1x16x32xbf16>
    tpu.vector_store %arg12[%c0_32, %c0_33, %c0_34], %69 {strides = array<i32>} : memref<1x16x32xbf16, #tpu.memory_space<vmem>>, vector<1x16x32xbf16>,
    %71 = vector.broadcast %53 : vector<4x16x1xf32> to vector<4x16x16xf32>
    %72 = arith.mulf %47, %71 : vector<4x16x16xf32>
    %73 = vector.shape_cast %72 : vector<4x16x16xf32> to vector<4x1x16x16xf32>
    %cst_35 = arith.constant dense<0.000000e+00> : vector<1x16x16xf32>
    %74 = vector.multi_reduction <add>, %73, %cst_35 [0] : vector<4x1x16x16xf32> to vector<1x16x16xf32>
    %cst_36 = arith.constant 4.000000e+00 : f32
    %75 = vector.broadcast %cst_36 : f32 to vector<1x16x16xf32>
    %76 = arith.divf %74, %75 : vector<1x16x16xf32>
    %77 = arith.truncf %76 : vector<1x16x16xf32> to vector<1x16x16xbf16>
    %c0_37 = arith.constant 0 : index
    %c0_38 = arith.constant 0 : index
    %c0_39 = arith.constant 0 : index
    %78 = vector.load %arg13[%c0_37, %c0_38, %c0_39] : memref<1x16x16xbf16, #tpu.memory_space<vmem>>, vector<1x16x16xbf16>
    tpu.vector_store %arg13[%c0_37, %c0_38, %c0_39], %77 {strides = array<i32>} : memref<1x16x16xbf16, #tpu.memory_space<vmem>>, vector<1x16x16xbf16>,
    return
  }
  func.func @transform_0(%arg0: i32) -> (i32, i32, i32) {
    %c0_i32 = arith.constant 0 : i32
    %c0_i32_0 = arith.constant 0 : i32
    %c0_i32_1 = arith.constant 0 : i32
    return %arg0, %c0_i32, %c0_i32_0 : i32, i32, i32
  }
  func.func @transform_1(%arg0: i32) -> (i32, i32, i32) {
    %c0_i32 = arith.constant 0 : i32
    %c0_i32_0 = arith.constant 0 : i32
    %c0_i32_1 = arith.constant 0 : i32
    return %arg0, %c0_i32, %c0_i32_0 : i32, i32, i32
  }
  func.func @transform_2(%arg0: i32) -> (i32, i32, i32) {
    %c0_i32 = arith.constant 0 : i32
    %c0_i32_0 = arith.constant 0 : i32
    %c0_i32_1 = arith.constant 0 : i32
    return %arg0, %c0_i32, %c0_i32_0 : i32, i32, i32
  }
  func.func @transform_3(%arg0: i32) -> (i32, i32) {
    %c0_i32 = arith.constant 0 : i32
    %c0_i32_0 = arith.constant 0 : i32
    %c0_i32_1 = arith.constant 0 : i32
    return %c0_i32, %c0_i32_0 : i32, i32
  }
  func.func @transform_4(%arg0: i32) -> (i32, i32) {
    %c0_i32 = arith.constant 0 : i32
    %c0_i32_0 = arith.constant 0 : i32
    %c0_i32_1 = arith.constant 0 : i32
    return %c0_i32, %c0_i32_0 : i32, i32
  }
  func.func @transform_5(%arg0: i32) -> (i32, i32) {
    %c0_i32 = arith.constant 0 : i32
    %c0_i32_0 = arith.constant 0 : i32
    %c0_i32_1 = arith.constant 0 : i32
    return %c0_i32, %c0_i32_0 : i32, i32
  }
  func.func @transform_6(%arg0: i32) -> (i32, i32) {
    %c0_i32 = arith.constant 0 : i32
    %c0_i32_0 = arith.constant 0 : i32
    %c0_i32_1 = arith.constant 0 : i32
    return %c0_i32, %c0_i32_0 : i32, i32
  }
  func.func @transform_7(%arg0: i32) -> (i32, i32) {
    %c0_i32 = arith.constant 0 : i32
    %c0_i32_0 = arith.constant 0 : i32
    %c0_i32_1 = arith.constant 0 : i32
    return %c0_i32, %c0_i32_0 : i32, i32
  }
  func.func @transform_8(%arg0: i32) -> (i32, i32) {
    %c0_i32 = arith.constant 0 : i32
    %c0_i32_0 = arith.constant 0 : i32
    %c0_i32_1 = arith.constant 0 : i32
    return %c0_i32, %c0_i32_0 : i32, i32
  }
  func.func @transform_9(%arg0: i32) -> (i32, i32) {
    %c0_i32 = arith.constant 0 : i32
    %c0_i32_0 = arith.constant 0 : i32
    %c0_i32_1 = arith.constant 0 : i32
    return %c0_i32, %c0_i32_0 : i32, i32
  }
  func.func @transform_10(%arg0: i32) -> (i32, i32) {
    %c0_i32 = arith.constant 0 : i32
    %c0_i32_0 = arith.constant 0 : i32
    %c0_i32_1 = arith.constant 0 : i32
    return %c0_i32, %c0_i32_0 : i32, i32
  }
  func.func @transform_11(%arg0: i32) -> (i32, i32, i32) {
    %c0_i32 = arith.constant 0 : i32
    %c0_i32_0 = arith.constant 0 : i32
    %c0_i32_1 = arith.constant 0 : i32
    return %arg0, %c0_i32, %c0_i32_0 : i32, i32, i32
  }
  func.func @transform_12(%arg0: i32) -> (i32, i32, i32) {
    %c0_i32 = arith.constant 0 : i32
    %c0_i32_0 = arith.constant 0 : i32
    %c0_i32_1 = arith.constant 0 : i32
    return %arg0, %c0_i32, %c0_i32_0 : i32, i32, i32
  }
}

</mosaic_0001>

<llo_original>
// kernel: tpu_custom_call.1
$region0: #{tpu_custom_call.1}
  #allocation0 [shape = 'u32[]', space=smem, size = 0x4, offset = 0x4, fixed_abs, tag = 'smem constant byte address 0x4 - core index']
  #allocation1 [shape = 'u32[144,128]{1,0:T(1,128)}', space=vmem, size = 0x12000, scoped, tag = 'internal scratch']
  %s0 = inlined_call_operand.hbm [shape: bf16[4,16,32], index: 0, kind: input, shape index: {}]
  %s1 = inlined_call_operand.hbm [shape: bf16[4,16,32], index: 1, kind: input, shape index: {}]
  %s2 = inlined_call_operand.hbm [shape: bf16[4,16,32], index: 2, kind: input, shape index: {}]
  %s3 = inlined_call_operand.hbm [shape: bf16[32,32], index: 3, kind: input, shape index: {}]
  %s4 = inlined_call_operand.vmem [shape: f32[1,32], index: 4, kind: input, shape index: {}]
  %s5 = inlined_call_operand.vmem [shape: bf16[32,32], index: 5, kind: input, shape index: {}]
  %s6 = inlined_call_operand.vmem [shape: f32[1,32], index: 6, kind: input, shape index: {}]
  %s7 = inlined_call_operand.hbm [shape: bf16[32,32], index: 7, kind: input, shape index: {}]
  %s8 = inlined_call_operand.hbm [shape: f32[1,32], index: 8, kind: input, shape index: {}]
  %s9 = inlined_call_operand.vmem [shape: bf16[32,32], index: 9, kind: input, shape index: {}]
  %s10 = inlined_call_operand.vmem [shape: f32[1,32], index: 10, kind: input, shape index: {}]
  %s11 = inlined_call_operand.hbm [shape: bf16[4,16,32], index: 11, kind: output, shape index: {0}]
  %s12 = inlined_call_operand.hbm [shape: bf16[4,16,16], index: 12, kind: output, shape index: {1}]
  %13 = xla_tuple %s11, %s12
  %s14 = sld [smem:[#allocation0]]
  $region109: #{tpu_custom_call.1} parent=0
    _
  %s16 = ssub.s32 1, %s14
  %s17 = scalar_select 0, %s16, %s14
  $region1: #{tpu_custom_call.1} parent=0
    #allocation2 [shape = 'u8[8192]{0}', space=vmem, size = 0x2000, scoped, tag = 'input window, operand 0']
    #allocation3 [shape = 's32[2]{0}', space=sflag, size = 0x8, scoped, tag = 'scoped memory for tpu_custom_call.1']
    #allocation4 [shape = 's32[2]{0}', space=sflag, size = 0x8, scoped, tag = 'scoped memory for tpu_custom_call.1']
    #allocation5 [shape = 'u8[8192]{0}', space=vmem, size = 0x2000, scoped, tag = 'input window, operand 1']
    #allocation6 [shape = 's32[2]{0}', space=sflag, size = 0x8, scoped, tag = 'scoped memory for tpu_custom_call.1']
    #allocation7 [shape = 'u8[8192]{0}', space=vmem, size = 0x2000, scoped, tag = 'input window, operand 2']
    #allocation8 [shape = 'u8[8192]{0}', space=vmem, size = 0x2000, scoped, tag = 'input window, operand 3, single buffered']
    #allocation9 [shape = 's32[1]{0}', space=sflag, size = 0x4, scoped, tag = 'scoped memory for tpu_custom_call.1']
    #allocation10 [shape = 'u8[8192]{0}', space=vmem, size = 0x2000, scoped, tag = 'input window, operand 7, single buffered']
    #allocation11 [shape = 'u8[512]{0}', space=vmem, size = 0x400, scoped, tag = 'input window, operand 8, single buffered']
    #allocation12 [shape = 's32[1]{0}', space=sflag, size = 0x4, scoped, tag = 'scoped memory for tpu_custom_call.1']
    #allocation13 [shape = 'u8[8192]{0}', space=vmem, size = 0x2000, scoped, tag = 'output window, operand 0']
    #allocation14 [shape = 'u8[8192]{0}', space=vmem, size = 0x2000, scoped, tag = 'output window, operand 1']
    #allocation15 [shape = 's32[2]{0}', space=sflag, size = 0x8, scoped, tag = 'scoped memory for tpu_custom_call.1']
    %18 = vsyncpa [#allocation3], 0
    %s19 = scalar_lea.sflag [#allocation3], 1
    %20 = vsyncpa %s19, 0
    %21 = vsyncpa [#allocation6], 0
    %s22 = scalar_lea.sflag [#allocation6], 1
    %23 = vsyncpa %s22, 0
    %24 = vsyncpa [#allocation9], 0
    %25 = vsyncpa [#allocation12], 0
    %26 = vsyncpa [#allocation4], 0
    %s27 = scalar_lea.sflag [#allocation4], 1
    %28 = vsyncpa %s27, 0
    %29 = vsyncpa [#allocation15], 0
    %s30 = scalar_lea.sflag [#allocation15], 1
    %31 = vsyncpa %s30, 0
    loop: start=0, step=1, limit=6
    $region2: #{tpu_custom_call.1} parent=1 // loop_pre_header
      _
    $region3: #{tpu_custom_call.1} parent=1 // loop_header
      %s33 = sphi 0, %s37
      %p34 = scmp.ge.s32.totalorder %s33, 6
      %s43 = sphi 0, %s45
      %s46 = sphi 0, %s43
      %s47 = sphi 0, %s46
      %s63 = sphi 0, %s47
      %s69 = sphi 0, %s71
      %s72 = sphi 0, %s69
      %s73 = sphi 0, %s72
      %s89 = sphi 0, %s73
      %s95 = sphi 0, %s97
      %s98 = sphi 0, %s95
      %s99 = sphi 0, %s98
      %s115 = sphi 0, %s99
      %s119 = sphi 0, %s119
      %s121 = sphi 0, %s119
      %s122 = sphi 0, %s121
      %s136 = sphi 0, %s122
      %s140 = sphi 0, %s140
      %s142 = sphi 0, %s140
      %s143 = sphi 0, %s142
      %s157 = sphi 0, %s143
      %s161 = sphi 0, %s161
      %s163 = sphi 0, %s161
      %s164 = sphi 0, %s163
      %s178 = sphi 0, %s164
      %s182 = sphi 0, %s182
      %s184 = sphi 0, %s182
      %s185 = sphi 0, %s184
      %s199 = sphi 0, %s185
      %s203 = sphi 0, %s203
      %s205 = sphi 0, %s203
      %s206 = sphi 0, %s205
      %s220 = sphi 0, %s206
      %s224 = sphi 0, %s224
      %s226 = sphi 0, %s224
      %s227 = sphi 0, %s226
      %s241 = sphi 0, %s227
      %s245 = sphi 0, %s245
      %s247 = sphi 0, %s245
      %s248 = sphi 0, %s247
      %s262 = sphi 0, %s248
      %s266 = sphi 0, %s266
      %s268 = sphi 0, %s266
      %s269 = sphi 0, %s268
      %s283 = sphi 0, %s269
      %s289 = sphi 0, %s291
      %s292 = sphi 0, %s289
      %s293 = sphi 0, %s292
      %s309 = sphi 0, %s293
      %s315 = sphi 0, %s317
      %s318 = sphi 0, %s315
      %s319 = sphi 0, %s318
      %s335 = sphi 0, %s319
    $region4: #{tpu_custom_call.1} parent=1 // loop_header_branch
      %36 = sbr.rel (%p34) target = $region8
    $region5: #{tpu_custom_call.1} parent=1 // loop_body
      %s38 = ssub.s32 %s33, 1
      %s39 = ssub.s32 %s33, 2
      %s40 = sadd.s32 %s33, 1
      %s41 = ssub.s32 %s33, %s40
      %p42 = scmp.eq.s32.totalorder %s41, 0
      %s44 = sadd.s32 %s43, 1
      %s45 = scalar_select %p42, %s43, %s44
      %p48 = pneg %p42
      %p49 = scmp.eq.s32.totalorder %s33, 3
      %p50 = por %p48, %p49
      %p51 = scmp.ne.s32.totalorder %s43, %s46
      %p52 = scmp.eq.s32.totalorder %s33, 0
      %p53 = por %p51, %p52
      %p54 = scmp.ne.s32.totalorder %s43, %s46
      %p55 = scmp.eq.s32.totalorder %s38, 3
      %p56 = por %p54, %p55
      %p57 = scmp.ne.s32.totalorder %s46, %s47
      %p58 = scmp.eq.s32.totalorder %s38, 0
      %p59 = por %p57, %p58
      %p60 = scmp.ne.s32.totalorder %s46, %s47
      %p61 = scmp.eq.s32.totalorder %s39, 3
      %p62 = por %p60, %p61
      %p64 = scmp.ne.s32.totalorder %s47, %s63
      %p65 = scmp.eq.s32.totalorder %s39, 0
      %p66 = por %p64, %p65
      %s67 = ssub.s32 %s33, %s40
      %p68 = scmp.eq.s32.totalorder %s67, 0
      %s70 = sadd.s32 %s69, 1
      %s71 = scalar_select %p68, %s69, %s70
      %p74 = pneg %p68
      %p75 = scmp.eq.s32.totalorder %s33, 3
      %p76 = por %p74, %p75
      %p77 = scmp.ne.s32.totalorder %s69, %s72
      %p78 = scmp.eq.s32.totalorder %s33, 0
      %p79 = por %p77, %p78
      %p80 = scmp.ne.s32.totalorder %s69, %s72
      %p81 = scmp.eq.s32.totalorder %s38, 3
      %p82 = por %p80, %p81
      %p83 = scmp.ne.s32.totalorder %s72, %s73
      %p84 = scmp.eq.s32.totalorder %s38, 0
      %p85 = por %p83, %p84
      %p86 = scmp.ne.s32.totalorder %s72, %s73
      %p87 = scmp.eq.s32.totalorder %s39, 3
      %p88 = por %p86, %p87
      %p90 = scmp.ne.s32.totalorder %s73, %s89
      %p91 = scmp.eq.s32.totalorder %s39, 0
      %p92 = por %p90, %p91
      %s93 = ssub.s32 %s33, %s40
      %p94 = scmp.eq.s32.totalorder %s93, 0
      %s96 = sadd.s32 %s95, 1
      %s97 = scalar_select %p94, %s95, %s96
      %p100 = pneg %p94
      %p101 = scmp.eq.s32.totalorder %s33, 3
      %p102 = por %p100, %p101
      %p103 = scmp.ne.s32.totalorder %s95, %s98
      %p104 = scmp.eq.s32.totalorder %s33, 0
      %p105 = por %p103, %p104
      %p106 = scmp.ne.s32.totalorder %s95, %s98
      %p107 = scmp.eq.s32.totalorder %s38, 3
      %p108 = por %p106, %p107
      %p109 = scmp.ne.s32.totalorder %s98, %s99
      %p110 = scmp.eq.s32.totalorder %s38, 0
      %p111 = por %p109, %p110
      %p112 = scmp.ne.s32.totalorder %s98, %s99
      %p113 = scmp.eq.s32.totalorder %s39, 3
      %p114 = por %p112, %p113
      %p116 = scmp.ne.s32.totalorder %s99, %s115
      %p117 = scmp.eq.s32.totalorder %s39, 0
      %p118 = por %p116, %p117
      %s120 = sadd.s32 %s119, 1
      %p123 = scmp.eq.s32.totalorder %s33, 3
      %p124 = scmp.ne.s32.totalorder %s119, %s121
      %p125 = scmp.eq.s32.totalorder %s33, 0
      %p126 = por %p124, %p125
      %p127 = scmp.ne.s32.totalorder %s119, %s121
      %p128 = scmp.eq.s32.totalorder %s38, 3
      %p129 = por %p127, %p128
      %p130 = scmp.ne.s32.totalorder %s121, %s122
      %p131 = scmp.eq.s32.totalorder %s38, 0
      %p132 = por %p130, %p131
      %p133 = scmp.ne.s32.totalorder %s121, %s122
      %p134 = scmp.eq.s32.totalorder %s39, 3
      %p135 = por %p133, %p134
      %p137 = scmp.ne.s32.totalorder %s122, %s136
      %p138 = scmp.eq.s32.totalorder %s39, 0
      %p139 = por %p137, %p138
      %s141 = sadd.s32 %s140, 1
      %p144 = scmp.eq.s32.totalorder %s33, 3
      %p145 = scmp.ne.s32.totalorder %s140, %s142
      %p146 = scmp.eq.s32.totalorder %s33, 0
      %p147 = por %p145, %p146
      %p148 = scmp.ne.s32.totalorder %s140, %s142
      %p149 = scmp.eq.s32.totalorder %s38, 3
      %p150 = por %p148, %p149
      %p151 = scmp.ne.s32.totalorder %s142, %s143
      %p152 = scmp.eq.s32.totalorder %s38, 0
      %p153 = por %p151, %p152
      %p154 = scmp.ne.s32.totalorder %s142, %s143
      %p155 = scmp.eq.s32.totalorder %s39, 3
      %p156 = por %p154, %p155
      %p158 = scmp.ne.s32.totalorder %s143, %s157
      %p159 = scmp.eq.s32.totalorder %s39, 0
      %p160 = por %p158, %p159
      %s162 = sadd.s32 %s161, 1
      %p165 = scmp.eq.s32.totalorder %s33, 3
      %p166 = scmp.ne.s32.totalorder %s161, %s163
      %p167 = scmp.eq.s32.totalorder %s33, 0
      %p168 = por %p166, %p167
      %p169 = scmp.ne.s32.totalorder %s161, %s163
      %p170 = scmp.eq.s32.totalorder %s38, 3
      %p171 = por %p169, %p170
      %p172 = scmp.ne.s32.totalorder %s163, %s164
      %p173 = scmp.eq.s32.totalorder %s38, 0
      %p174 = por %p172, %p173
      %p175 = scmp.ne.s32.totalorder %s163, %s164
      %p176 = scmp.eq.s32.totalorder %s39, 3
      %p177 = por %p175, %p176
      %p179 = scmp.ne.s32.totalorder %s164, %s178
      %p180 = scmp.eq.s32.totalorder %s39, 0
      %p181 = por %p179, %p180
      %s183 = sadd.s32 %s182, 1
      %p186 = scmp.eq.s32.totalorder %s33, 3
      %p187 = scmp.ne.s32.totalorder %s182, %s184
      %p188 = scmp.eq.s32.totalorder %s33, 0
      %p189 = por %p187, %p188
      %p190 = scmp.ne.s32.totalorder %s182, %s184
      %p191 = scmp.eq.s32.totalorder %s38, 3
      %p192 = por %p190, %p191
      %p193 = scmp.ne.s32.totalorder %s184, %s185
      %p194 = scmp.eq.s32.totalorder %s38, 0
      %p195 = por %p193, %p194
      %p196 = scmp.ne.s32.totalorder %s184, %s185
      %p197 = scmp.eq.s32.totalorder %s39, 3
      %p198 = por %p196, %p197
      %p200 = scmp.ne.s32.totalorder %s185, %s199
      %p201 = scmp.eq.s32.totalorder %s39, 0
      %p202 = por %p200, %p201
      %s204 = sadd.s32 %s203, 1
      %p207 = scmp.eq.s32.totalorder %s33, 3
      %p208 = scmp.ne.s32.totalorder %s203, %s205
      %p209 = scmp.eq.s32.totalorder %s33, 0
      %p210 = por %p208, %p209
      %p211 = scmp.ne.s32.totalorder %s203, %s205
      %p212 = scmp.eq.s32.totalorder %s38, 3
      %p213 = por %p211, %p212
      %p214 = scmp.ne.s32.totalorder %s205, %s206
      %p215 = scmp.eq.s32.totalorder %s38, 0
      %p216 = por %p214, %p215
      %p217 = scmp.ne.s32.totalorder %s205, %s206
      %p218 = scmp.eq.s32.totalorder %s39, 3
      %p219 = por %p217, %p218
      %p221 = scmp.ne.s32.totalorder %s206, %s220
      %p222 = scmp.eq.s32.totalorder %s39, 0
      %p223 = por %p221, %p222
      %s225 = sadd.s32 %s224, 1
      %p228 = scmp.eq.s32.totalorder %s33, 3
      %p229 = scmp.ne.s32.totalorder %s224, %s226
      %p230 = scmp.eq.s32.totalorder %s33, 0
      %p231 = por %p229, %p230
      %p232 = scmp.ne.s32.totalorder %s224, %s226
      %p233 = scmp.eq.s32.totalorder %s38, 3
      %p234 = por %p232, %p233
      %p235 = scmp.ne.s32.totalorder %s226, %s227
      %p236 = scmp.eq.s32.totalorder %s38, 0
      %p237 = por %p235, %p236
      %p238 = scmp.ne.s32.totalorder %s226, %s227
      %p239 = scmp.eq.s32.totalorder %s39, 3
      %p240 = por %p238, %p239
      %p242 = scmp.ne.s32.totalorder %s227, %s241
      %p243 = scmp.eq.s32.totalorder %s39, 0
      %p244 = por %p242, %p243
      %s246 = sadd.s32 %s245, 1
      %p249 = scmp.eq.s32.totalorder %s33, 3
      %p250 = scmp.ne.s32.totalorder %s245, %s247
      %p251 = scmp.eq.s32.totalorder %s33, 0
      %p252 = por %p250, %p251
      %p253 = scmp.ne.s32.totalorder %s245, %s247
      %p254 = scmp.eq.s32.totalorder %s38, 3
      %p255 = por %p253, %p254
      %p256 = scmp.ne.s32.totalorder %s247, %s248
      %p257 = scmp.eq.s32.totalorder %s38, 0
      %p258 = por %p256, %p257
      %p259 = scmp.ne.s32.totalorder %s247, %s248
      %p260 = scmp.eq.s32.totalorder %s39, 3
      %p261 = por %p259, %p260
      %p263 = scmp.ne.s32.totalorder %s248, %s262
      %p264 = scmp.eq.s32.totalorder %s39, 0
      %p265 = por %p263, %p264
      %s267 = sadd.s32 %s266, 1
      %p270 = scmp.eq.s32.totalorder %s33, 3
      %p271 = scmp.ne.s32.totalorder %s266, %s268
      %p272 = scmp.eq.s32.totalorder %s33, 0
      %p273 = por %p271, %p272
      %p274 = scmp.ne.s32.totalorder %s266, %s268
      %p275 = scmp.eq.s32.totalorder %s38, 3
      %p276 = por %p274, %p275
      %p277 = scmp.ne.s32.totalorder %s268, %s269
      %p278 = scmp.eq.s32.totalorder %s38, 0
      %p279 = por %p277, %p278
      %p280 = scmp.ne.s32.totalorder %s268, %s269
      %p281 = scmp.eq.s32.totalorder %s39, 3
      %p282 = por %p280, %p281
      %p284 = scmp.ne.s32.totalorder %s269, %s283
      %p285 = scmp.eq.s32.totalorder %s39, 0
      %p286 = por %p284, %p285
      %s287 = ssub.s32 %s33, %s40
      %p288 = scmp.eq.s32.totalorder %s287, 0
      %s290 = sadd.s32 %s289, 1
      %s291 = scalar_select %p288, %s289, %s290
      %p294 = pneg %p288
      %p295 = scmp.eq.s32.totalorder %s33, 3
      %p296 = por %p294, %p295
      %p297 = scmp.ne.s32.totalorder %s289, %s292
      %p298 = scmp.eq.s32.totalorder %s33, 0
      %p299 = por %p297, %p298
      %p300 = scmp.ne.s32.totalorder %s289, %s292
      %p301 = scmp.eq.s32.totalorder %s38, 3
      %p302 = por %p300, %p301
      %p303 = scmp.ne.s32.totalorder %s292, %s293
      %p304 = scmp.eq.s32.totalorder %s38, 0
      %p305 = por %p303, %p304
      %p306 = scmp.ne.s32.totalorder %s292, %s293
      %p307 = scmp.eq.s32.totalorder %s39, 3
      %p308 = por %p306, %p307
      %p310 = scmp.ne.s32.totalorder %s293, %s309
      %p311 = scmp.eq.s32.totalorder %s39, 0
      %p312 = por %p310, %p311
      %s313 = ssub.s32 %s33, %s40
      %p314 = scmp.eq.s32.totalorder %s313, 0
      %s316 = sadd.s32 %s315, 1
      %s317 = scalar_select %p314, %s315, %s316
      %p320 = pneg %p314
      %p321 = scmp.eq.s32.totalorder %s33, 3
      %p322 = por %p320, %p321
      %p323 = scmp.ne.s32.totalorder %s315, %s318
      %p324 = scmp.eq.s32.totalorder %s33, 0
      %p325 = por %p323, %p324
      %p326 = scmp.ne.s32.totalorder %s315, %s318
      %p327 = scmp.eq.s32.totalorder %s38, 3
      %p328 = por %p326, %p327
      %p329 = scmp.ne.s32.totalorder %s318, %s319
      %p330 = scmp.eq.s32.totalorder %s38, 0
      %p331 = por %p329, %p330
      %p332 = scmp.ne.s32.totalorder %s318, %s319
      %p333 = scmp.eq.s32.totalorder %s39, 3
      %p334 = por %p332, %p333
      %p336 = scmp.ne.s32.totalorder %s319, %s335
      %p337 = scmp.eq.s32.totalorder %s39, 0
      %p338 = por %p336, %p337
      %p339 = scmp.le.s32.totalorder 1, %s33
      %p340 = scmp.lt.s32.totalorder %s33, 5
      %p341 = pnand %p339, %p340
      %p342 = pneg %p341
      // Predicated region
      $region9: #{tpu_custom_call.1} parent=5 // pred_check
        _
      $region10: #{tpu_custom_call.1} parent=5 // pred_check_branch
        %344 = sbr.rel (%p341) target = $region12
      $region11: #{tpu_custom_call.1} parent=5 // pred_region
        %s345 = ssub.s32 %s33, 1
        // Predicated region
        $region13: #{tpu_custom_call.1} parent=11 // pred_check
          %p346 = pneg %p132
        $region14: #{tpu_custom_call.1} parent=11 // pred_check_branch
          %348 = sbr.rel (%p346) target = $region16
        $region15: #{tpu_custom_call.1} parent=11 // pred_region
          %s350 = ssub.s32 256, 256
          %351 = vsyncadd [#allocation9], %s350
          %s352 = sshll.u32 [#allocation8], 4
          %s353 = int_to_ptr.vmem [resolvable:$true] %s352
          %358 = dma.hbm_to_vmem [thread:$0]  %s3, 256, %s353, [#allocation9], 64, 64, 4
        $region16: #{tpu_custom_call.1} parent=11 // pred_fallthru
          _
        // Predicated region
        $region17: #{tpu_custom_call.1} parent=11 // pred_check
          %p359 = pneg %p153
        $region18: #{tpu_custom_call.1} parent=11 // pred_check_branch
          %361 = sbr.rel (%p359) target = $region20
        $region19: #{tpu_custom_call.1} parent=11 // pred_region
          _
        $region20: #{tpu_custom_call.1} parent=11 // pred_fallthru
          _
        // Predicated region
        $region21: #{tpu_custom_call.1} parent=11 // pred_check
          %p362 = pneg %p174
        $region22: #{tpu_custom_call.1} parent=11 // pred_check_branch
          %364 = sbr.rel (%p362) target = $region24
        $region23: #{tpu_custom_call.1} parent=11 // pred_region
          _
        $region24: #{tpu_custom_call.1} parent=11 // pred_fallthru
          _
        // Predicated region
        $region25: #{tpu_custom_call.1} parent=11 // pred_check
          %p365 = pneg %p195
        $region26: #{tpu_custom_call.1} parent=11 // pred_check_branch
          %367 = sbr.rel (%p365) target = $region28
        $region27: #{tpu_custom_call.1} parent=11 // pred_region
          _
        $region28: #{tpu_custom_call.1} parent=11 // pred_fallthru
          _
        // Predicated region
        $region29: #{tpu_custom_call.1} parent=11 // pred_check
          %p368 = pneg %p216
        $region30: #{tpu_custom_call.1} parent=11 // pred_check_branch
          %370 = sbr.rel (%p368) target = $region32
        $region31: #{tpu_custom_call.1} parent=11 // pred_region
          %s372 = ssub.s32 256, 256
          %373 = vsyncadd [#allocation9], %s372
          %s374 = sshll.u32 [#allocation10], 4
          %s375 = int_to_ptr.vmem [resolvable:$true] %s374
          %380 = dma.hbm_to_vmem [thread:$0]  %s7, 256, %s375, [#allocation9], 64, 64, 4
        $region32: #{tpu_custom_call.1} parent=11 // pred_fallthru
          _
        // Predicated region
        $region33: #{tpu_custom_call.1} parent=11 // pred_check
          %p381 = pneg %p237
        $region34: #{tpu_custom_call.1} parent=11 // pred_check_branch
          %383 = sbr.rel (%p381) target = $region36
        $region35: #{tpu_custom_call.1} parent=11 // pred_region
          %s385 = ssub.s32 16, 16
          %386 = vsyncadd [#allocation12], %s385
          %s388 = sshll.u32 [#allocation11], 4
          %s389 = int_to_ptr.vmem [resolvable:$true] %s388
          %391 = dma.hbm_to_vmem [thread:$0]  %s8, 16, %s389, [#allocation12]
        $region36: #{tpu_custom_call.1} parent=11 // pred_fallthru
          _
        // Predicated region
        $region37: #{tpu_custom_call.1} parent=11 // pred_check
          %p392 = pneg %p258
        $region38: #{tpu_custom_call.1} parent=11 // pred_check_branch
          %394 = sbr.rel (%p392) target = $region40
        $region39: #{tpu_custom_call.1} parent=11 // pred_region
          _
        $region40: #{tpu_custom_call.1} parent=11 // pred_fallthru
          _
        // Predicated region
        $region41: #{tpu_custom_call.1} parent=11 // pred_check
          %p395 = pneg %p279
        $region42: #{tpu_custom_call.1} parent=11 // pred_check_branch
          %397 = sbr.rel (%p395) target = $region44
        $region43: #{tpu_custom_call.1} parent=11 // pred_region
          _
        $region44: #{tpu_custom_call.1} parent=11 // pred_fallthru
          _
      $region12: #{tpu_custom_call.1} parent=5 // pred_fallthru
        _
      %p398 = scmp.lt.s32.totalorder %s33, 4
      // Predicated region
      $region45: #{tpu_custom_call.1} parent=5 // pred_check
        %p399 = pneg %p398
      $region46: #{tpu_custom_call.1} parent=5 // pred_check_branch
        %401 = sbr.rel (%p399) target = $region48
      $region47: #{tpu_custom_call.1} parent=5 // pred_region
        // Predicated region
        $region49: #{tpu_custom_call.1} parent=47 // pred_check
          %p402 = pneg %p53
        $region50: #{tpu_custom_call.1} parent=47 // pred_check_branch
          %404 = sbr.rel (%p402) target = $region52
        $region51: #{tpu_custom_call.1} parent=47 // pred_region
          %s405 = sand.u32 %s43, 1
          %s406 = scalar_lea.sflag [#allocation3], %s405
          %s407 = sand.u32 %s43, 1
          %s408 = smul.addr %s407, 8
          %s409 = scalar_lea.vmem [#allocation2], %s408
          %s411 = ssub.s32 128, 128
          %412 = vsyncadd %s406, %s411
          %s413 = smul.addr %s33, 2
          %s414 = smul.addr %s413, 64
          %s415 = scalar_lea.hbm %s0, %s414
          %s416 = sshll.u32 %s409, 4
          %s417 = int_to_ptr.vmem [resolvable:$true] %s416
          %422 = dma.hbm_to_vmem [thread:$0]  %s415, 128, %s417, %s406, 64, 64, 4
        $region52: #{tpu_custom_call.1} parent=47 // pred_fallthru
          _
        // Predicated region
        $region53: #{tpu_custom_call.1} parent=47 // pred_check
          %p423 = pneg %p79
        $region54: #{tpu_custom_call.1} parent=47 // pred_check_branch
          %425 = sbr.rel (%p423) target = $region56
        $region55: #{tpu_custom_call.1} parent=47 // pred_region
          %s426 = sand.u32 %s33, 1
          %s427 = scalar_lea.sflag [#allocation6], %s426
          %s428 = sand.u32 %s69, 1
          %s429 = smul.addr %s428, 8
          %s430 = scalar_lea.vmem [#allocation5], %s429
          %s432 = ssub.s32 128, 128
          %433 = vsyncadd %s427, %s432
          %s434 = smul.addr %s33, 2
          %s435 = smul.addr %s434, 64
          %s436 = scalar_lea.hbm %s1, %s435
          %s437 = sshll.u32 %s430, 4
          %s438 = int_to_ptr.vmem [resolvable:$true] %s437
          %443 = dma.hbm_to_vmem [thread:$0]  %s436, 128, %s438, %s427, 64, 64, 4
        $region56: #{tpu_custom_call.1} parent=47 // pred_fallthru
          _
        // Predicated region
        $region57: #{tpu_custom_call.1} parent=47 // pred_check
          %p444 = pneg %p105
        $region58: #{tpu_custom_call.1} parent=47 // pred_check_branch
          %446 = sbr.rel (%p444) target = $region60
        $region59: #{tpu_custom_call.1} parent=47 // pred_region
          %s447 = sand.u32 %s33, 1
          %s448 = scalar_lea.sflag [#allocation6], %s447
          %s449 = sand.u32 %s95, 1
          %s450 = smul.addr %s449, 8
          %s451 = scalar_lea.vmem [#allocation7], %s450
          %s453 = ssub.s32 128, 128
          %454 = vsyncadd %s448, %s453
          %s455 = smul.addr %s33, 2
          %s456 = smul.addr %s455, 64
          %s457 = scalar_lea.hbm %s2, %s456
          %s458 = sshll.u32 %s451, 4
          %s459 = int_to_ptr.vmem [resolvable:$true] %s458
          %464 = dma.hbm_to_vmem [thread:$0]  %s457, 128, %s459, %s448, 64, 64, 4
        $region60: #{tpu_custom_call.1} parent=47 // pred_fallthru
          _
      $region48: #{tpu_custom_call.1} parent=5 // pred_fallthru
        _
      %p465 = scmp.le.s32.totalorder 1, %s33
      %p466 = scmp.lt.s32.totalorder %s33, 5
      %p467 = pnand %p465, %p466
      %p468 = pneg %p467
      // Predicated region
      $region61: #{tpu_custom_call.1} parent=5 // pred_check
        _
      $region62: #{tpu_custom_call.1} parent=5 // pred_check_branch
        %470 = sbr.rel (%p467) target = $region64
      $region63: #{tpu_custom_call.1} parent=5 // pred_region
        %s471 = ssub.s32 %s33, 1
        %s472 = sand.u32 %s46, 1
        %s473 = scalar_lea.sflag [#allocation3], %s472
        %s474 = sand.u32 %s46, 1
        %s475 = smul.addr %s474, 8
        %s476 = scalar_lea.vmem [#allocation2], %s475
        // Predicated region
        $region65: #{tpu_custom_call.1} parent=63 // pred_check
          %p477 = pneg %p59
        $region66: #{tpu_custom_call.1} parent=63 // pred_check_branch
          %479 = sbr.rel (%p477) target = $region68
        $region67: #{tpu_custom_call.1} parent=63 // pred_region
          %480 = dma.done %s473, 128
        $region68: #{tpu_custom_call.1} parent=63 // pred_fallthru
          _
        %s481 = sand.u32 %s38, 1
        %s482 = scalar_lea.sflag [#allocation6], %s481
        %s483 = sand.u32 %s72, 1
        %s484 = smul.addr %s483, 8
        %s485 = scalar_lea.vmem [#allocation5], %s484
        // Predicated region
        $region69: #{tpu_custom_call.1} parent=63 // pred_check
          %p486 = pneg %p85
        $region70: #{tpu_custom_call.1} parent=63 // pred_check_branch
          %488 = sbr.rel (%p486) target = $region72
        $region71: #{tpu_custom_call.1} parent=63 // pred_region
          %489 = dma.done %s482, 128
        $region72: #{tpu_custom_call.1} parent=63 // pred_fallthru
          _
        %s490 = sand.u32 %s38, 1
        %s491 = scalar_lea.sflag [#allocation6], %s490
        %s492 = sand.u32 %s98, 1
        %s493 = smul.addr %s492, 8
        %s494 = scalar_lea.vmem [#allocation7], %s493
        // Predicated region
        $region73: #{tpu_custom_call.1} parent=63 // pred_check
          %p495 = pneg %p111
        $region74: #{tpu_custom_call.1} parent=63 // pred_check_branch
          %497 = sbr.rel (%p495) target = $region76
        $region75: #{tpu_custom_call.1} parent=63 // pred_region
          %498 = dma.done %s491, 128
        $region76: #{tpu_custom_call.1} parent=63 // pred_fallthru
          _
        // Predicated region
        $region77: #{tpu_custom_call.1} parent=63 // pred_check
          %p499 = pneg %p132
        $region78: #{tpu_custom_call.1} parent=63 // pred_check_branch
          %501 = sbr.rel (%p499) target = $region80
        $region79: #{tpu_custom_call.1} parent=63 // pred_region
          %502 = dma.done [#allocation9], 256
        $region80: #{tpu_custom_call.1} parent=63 // pred_fallthru
          _
        // Predicated region
        $region81: #{tpu_custom_call.1} parent=63 // pred_check
          %p503 = pneg %p216
        $region82: #{tpu_custom_call.1} parent=63 // pred_check_branch
          %505 = sbr.rel (%p503) target = $region84
        $region83: #{tpu_custom_call.1} parent=63 // pred_region
          %506 = dma.done [#allocation9], 256
        $region84: #{tpu_custom_call.1} parent=63 // pred_fallthru
          _
        // Predicated region
        $region85: #{tpu_custom_call.1} parent=63 // pred_check
          %p507 = pneg %p237
        $region86: #{tpu_custom_call.1} parent=63 // pred_check_branch
          %509 = sbr.rel (%p507) target = $region88
        $region87: #{tpu_custom_call.1} parent=63 // pred_region
          %510 = dma.done [#allocation12], 16
        $region88: #{tpu_custom_call.1} parent=63 // pred_fallthru
          _
        %s511 = sand.u32 %s46, 1
        %s512 = scalar_lea.sflag [#allocation3], %s511
        %s513 = sand.u32 %s46, 1
        %s514 = smul.addr %s513, 8
        %s515 = scalar_lea.vmem [#allocation2], %s514
        %p516 = pneg %p59
        %p517 = pneg %p56
        %s518 = sand.u32 %s38, 1
        %s519 = scalar_lea.sflag [#allocation6], %s518
        %s520 = sand.u32 %s72, 1
        %s521 = smul.addr %s520, 8
        %s522 = scalar_lea.vmem [#allocation5], %s521
        %p523 = pneg %p85
        %p524 = pneg %p82
        %s525 = sand.u32 %s38, 1
        %s526 = scalar_lea.sflag [#allocation6], %s525
        %s527 = sand.u32 %s98, 1
        %s528 = smul.addr %s527, 8
        %s529 = scalar_lea.vmem [#allocation7], %s528
        %p530 = pneg %p111
        %p531 = pneg %p108
        %p532 = pneg %p132
        %p533 = pneg %p129
        %p534 = pneg %p153
        %p535 = pneg %p150
        %p536 = pneg %p174
        %p537 = pneg %p171
        %p538 = pneg %p195
        %p539 = pneg %p192
        %p540 = pneg %p216
        %p541 = pneg %p213
        %p542 = pneg %p237
        %p543 = pneg %p234
        %p544 = pneg %p258
        %p545 = pneg %p255
        %p546 = pneg %p279
        %p547 = pneg %p276
        %p548 = pneg %p305
        %p549 = pneg %p302
        %s550 = sand.u32 %s292, 1
        %s551 = scalar_lea.sflag [#allocation4], %s550
        %s552 = sand.u32 %s292, 1
        %s553 = smul.addr %s552, 8
        %s554 = scalar_lea.vmem [#allocation13], %s553
        %p555 = pneg %p331
        %p556 = pneg %p328
        %s557 = sand.u32 %s318, 1
        %s558 = scalar_lea.sflag [#allocation15], %s557
        %s559 = sand.u32 %s318, 1
        %s560 = smul.addr %s559, 8
        %s561 = scalar_lea.vmem [#allocation14], %s560
        %v563 = vld [vmem:[%s476] sm:$0xf]
        %v564 = vld [vmem:[%s476 + $0x4] sm:$0xf]
        %v565 = vld [vmem:[%s485] sm:$0xf]
        %v566 = vld [vmem:[%s485 + $0x4] sm:$0xf]
        %v567 = vld [vmem:[%s494] sm:$0xf]
        %v568 = vld [vmem:[%s494 + $0x4] sm:$0xf]
        %v569 = vld [vmem:[#allocation8] sm:$0xf]
        %v570 = vld [vmem:[#allocation8 + $0x4] sm:$0xf]
        %v571 = vld [vmem:[#allocation8 + $0x8] sm:$0xf]
        %v572 = vld [vmem:[#allocation8 + $0xc] sm:$0xf]
        %v573 = vld [vmem:[%s4] sm:$0x1]
        %v575 = vlaneseq
        %v576 = vshrl.u32 %v575, 7
        %v577 = vsub.s32 0, %v576
        %v578 = vrot.slane %v573, %v577
        %v582 = vunpack.c.l.b16 %v563
        %v583 = vunpack.c.l.b16 %v564
        %v584 = vpack.c.b16 %v583, %v582
        %v589 = vunpack.c.l.b16 %v569
        %v590 = vunpack.c.l.b16 %v570
        %v591 = vunpack.c.l.b16 %v571
        %v592 = vunpack.c.l.b16 %v572
        %v593 = vpack.c.b16 %v590, %v589
        %v594 = vpack.c.b16 %v592, %v591
        %vm597 = vcmask 261120
        %v599 = vsel %vm597, %v584, 0
        %601 = vmatprep.subr.bf16.mxu0 0
        %602 = vmatpush1.bf16.msra.mxu0 %v593
        %603 = vmatprep.subr.bf16.mxu0 0
        %604 = vmatpush1.bf16.msra.mxu0 %v594
        %605 = vmatprep.subr.bf16.mxu0 0
        %606 = vmatpush1.bf16.msra.mxu0 0
        %607 = vmatprep.subr.bf16.mxu0 0
        %608 = vmatpush1.bf16.msra.mxu0 0
        %609 = vmatprep.subr.bf16.mxu0 0
        %610 = vmatpush1.bf16.msra.mxu0 0
        %611 = vmatprep.subr.bf16.mxu0 0
        %612 = vmatpush1.bf16.msra.mxu0 0
        %613 = vmatprep.subr.bf16.mxu0 0
        %614 = vmatpush1.bf16.msra.mxu0 0
        %615 = vmatprep.subr.bf16.mxu0 0
        %616 = vmatpush1.bf16.msra.mxu0 0
        %617 = vmatprep.subr.bf16.mxu0 0
        %618 = vmatpush1.bf16.msra.mxu0 0
        %619 = vmatprep.subr.bf16.mxu0 0
        %620 = vmatpush1.bf16.msra.mxu0 0
        %621 = vmatprep.subr.bf16.mxu0 0
        %622 = vmatpush1.bf16.msra.mxu0 0
        %623 = vmatprep.subr.bf16.mxu0 0
        %624 = vmatpush1.bf16.msra.mxu0 0
        %625 = vmatprep.subr.bf16.mxu0 0
        %626 = vmatpush1.bf16.msra.mxu0 0
        %627 = vmatprep.subr.bf16.mxu0 0
        %628 = vmatpush1.bf16.msra.mxu0 0
        %629 = vmatprep.subr.bf16.mxu0 0
        %630 = vmatpush1.bf16.msra.mxu0 0
        %631 = vmatprep.subr.bf16.mxu0 0
        %632 = vmatpush1.bf16.msra.mxu0 0
        %633 = vmatprep.mubr.bf16.mxu0 0
        %634 = vmatmul.mubr.bf16.gmra.mrb[0].mxu0 %v599
        %v635 = vpop.f32.mrb[0].mxu0
        %v636 = vadd.f32 %v578, %v635
        %v637 = vpop.f32.mrb[0].mxu0
        %v638 = vpop.f32.mrb[0].mxu0
        %v639 = vadd.f32 %v578, %v638
        %v640 = vpop.f32.mrb[0].mxu0
        %641 = vdwg.mxu0
        %v642 = vld [vmem:[%s5] sm:$0xf]
        %v643 = vld [vmem:[%s5 + $0x4] sm:$0xf]
        %v644 = vld [vmem:[%s5 + $0x8] sm:$0xf]
        %v645 = vld [vmem:[%s5 + $0xc] sm:$0xf]
        %v646 = vld [vmem:[%s6] sm:$0x1]
        %v648 = vlaneseq
        %v649 = vshrl.u32 %v648, 7
        %v650 = vsub.s32 0, %v649
        %v651 = vrot.slane %v646, %v650
        %v655 = vunpack.c.l.b16 %v565
        %v656 = vunpack.c.l.b16 %v566
        %v657 = vpack.c.b16 %v656, %v655
        %v662 = vunpack.c.l.b16 %v642
        %v663 = vunpack.c.l.b16 %v643
        %v664 = vunpack.c.l.b16 %v644
        %v665 = vunpack.c.l.b16 %v645
        %v666 = vpack.c.b16 %v663, %v662
        %v667 = vpack.c.b16 %v665, %v664
        %v671 = vsel %vm597, %v657, 0
        %673 = vmatprep.subr.bf16.mxu0 0
        %674 = vmatpush1.bf16.msra.mxu0 %v666
        %675 = vmatprep.subr.bf16.mxu0 0
        %676 = vmatpush1.bf16.msra.mxu0 %v667
        %677 = vmatprep.subr.bf16.mxu0 0
        %678 = vmatpush1.bf16.msra.mxu0 0
        %679 = vmatprep.subr.bf16.mxu0 0
        %680 = vmatpush1.bf16.msra.mxu0 0
        %681 = vmatprep.subr.bf16.mxu0 0
        %682 = vmatpush1.bf16.msra.mxu0 0
        %683 = vmatprep.subr.bf16.mxu0 0
        %684 = vmatpush1.bf16.msra.mxu0 0
        %685 = vmatprep.subr.bf16.mxu0 0
        %686 = vmatpush1.bf16.msra.mxu0 0
        %687 = vmatprep.subr.bf16.mxu0 0
        %688 = vmatpush1.bf16.msra.mxu0 0
        %689 = vmatprep.subr.bf16.mxu0 0
        %690 = vmatpush1.bf16.msra.mxu0 0
        %691 = vmatprep.subr.bf16.mxu0 0
        %692 = vmatpush1.bf16.msra.mxu0 0
        %693 = vmatprep.subr.bf16.mxu0 0
        %694 = vmatpush1.bf16.msra.mxu0 0
        %695 = vmatprep.subr.bf16.mxu0 0
        %696 = vmatpush1.bf16.msra.mxu0 0
        %697 = vmatprep.subr.bf16.mxu0 0
        %698 = vmatpush1.bf16.msra.mxu0 0
        %699 = vmatprep.subr.bf16.mxu0 0
        %700 = vmatpush1.bf16.msra.mxu0 0
        %701 = vmatprep.subr.bf16.mxu0 0
        %702 = vmatpush1.bf16.msra.mxu0 0
        %703 = vmatprep.subr.bf16.mxu0 0
        %704 = vmatpush1.bf16.msra.mxu0 0
        %705 = vmatprep.mubr.bf16.mxu0 0
        %706 = vmatmul.mubr.bf16.gmra.mrb[0].mxu0 %v671
        %v707 = vpop.f32.mrb[0].mxu0
        %v708 = vadd.f32 %v651, %v707
        %v709 = vpop.f32.mrb[0].mxu0
        %v710 = vpop.f32.mrb[0].mxu0
        %v711 = vadd.f32 %v651, %v710
        %v712 = vpop.f32.mrb[0].mxu0
        %713 = vdwg.mxu0
        %v714 = vld [vmem:[#allocation10] sm:$0xf]
        %v715 = vld [vmem:[#allocation10 + $0x4] sm:$0xf]
        %v716 = vld [vmem:[#allocation10 + $0x8] sm:$0xf]
        %v717 = vld [vmem:[#allocation10 + $0xc] sm:$0xf]
        %v718 = vld [vmem:[#allocation11] sm:$0x1]
        %v720 = vlaneseq
        %v721 = vshrl.u32 %v720, 7
        %v722 = vsub.s32 0, %v721
        %v723 = vrot.slane %v718, %v722
        %v727 = vunpack.c.l.b16 %v567
        %v728 = vunpack.c.l.b16 %v568
        %v729 = vpack.c.b16 %v728, %v727
        %v734 = vunpack.c.l.b16 %v714
        %v735 = vunpack.c.l.b16 %v715
        %v736 = vunpack.c.l.b16 %v716
        %v737 = vunpack.c.l.b16 %v717
        %v738 = vpack.c.b16 %v735, %v734
        %v739 = vpack.c.b16 %v737, %v736
        %v743 = vsel %vm597, %v729, 0
        %745 = vmatprep.subr.bf16.mxu0 0
        %746 = vmatpush1.bf16.msra.mxu0 %v738
        %747 = vmatprep.subr.bf16.mxu0 0
        %748 = vmatpush1.bf16.msra.mxu0 %v739
        %749 = vmatprep.subr.bf16.mxu0 0
        %750 = vmatpush1.bf16.msra.mxu0 0
        %751 = vmatprep.subr.bf16.mxu0 0
        %752 = vmatpush1.bf16.msra.mxu0 0
        %753 = vmatprep.subr.bf16.mxu0 0
        %754 = vmatpush1.bf16.msra.mxu0 0
        %755 = vmatprep.subr.bf16.mxu0 0
        %756 = vmatpush1.bf16.msra.mxu0 0
        %757 = vmatprep.subr.bf16.mxu0 0
        %758 = vmatpush1.bf16.msra.mxu0 0
        %759 = vmatprep.subr.bf16.mxu0 0
        %760 = vmatpush1.bf16.msra.mxu0 0
        %761 = vmatprep.subr.bf16.mxu0 0
        %762 = vmatpush1.bf16.msra.mxu0 0
        %763 = vmatprep.subr.bf16.mxu0 0
        %764 = vmatpush1.bf16.msra.mxu0 0
        %765 = vmatprep.subr.bf16.mxu0 0
        %766 = vmatpush1.bf16.msra.mxu0 0
        %767 = vmatprep.subr.bf16.mxu0 0
        %768 = vmatpush1.bf16.msra.mxu0 0
        %769 = vmatprep.subr.bf16.mxu0 0
        %770 = vmatpush1.bf16.msra.mxu0 0
        %771 = vmatprep.subr.bf16.mxu0 0
        %772 = vmatpush1.bf16.msra.mxu0 0
        %773 = vmatprep.subr.bf16.mxu0 0
        %774 = vmatpush1.bf16.msra.mxu0 0
        %775 = vmatprep.subr.bf16.mxu0 0
        %776 = vmatpush1.bf16.msra.mxu0 0
        %777 = vmatprep.mubr.bf16.mxu0 0
        %778 = vmatmul.mubr.bf16.gmra.mrb[0].mxu0 %v743
        %v779 = vpop.f32.mrb[0].mxu0
        %v780 = vadd.f32 %v723, %v779
        %v781 = vpop.f32.mrb[0].mxu0
        %v782 = vpop.f32.mrb[0].mxu0
        %v783 = vadd.f32 %v723, %v782
        %v784 = vpop.f32.mrb[0].mxu0
        %785 = vdwg.mxu0
        %v786 = vpack.c.bf16 %v639, %v636
        %v787 = vpack.c.bf16 %v711, %v708
        %v788 = vpack.c.bf16 %v783, %v780
        %790 = vrot.lane.b32.xlu0 %v786, 120
        %v791 = vpop.permute.xlu0 %790
        %792 = vrot.lane.b32.xlu0 %v786, 112
        %v793 = vpop.permute.xlu0 %792
        %794 = vrot.lane.b32.xlu0 %v786, 104
        %v795 = vpop.permute.xlu0 %794
        %797 = vrot.lane.b32.xlu0 %v787, 120
        %v798 = vpop.permute.xlu0 %797
        %799 = vrot.lane.b32.xlu0 %v787, 112
        %v800 = vpop.permute.xlu0 %799
        %801 = vrot.lane.b32.xlu0 %v787, 104
        %v802 = vpop.permute.xlu0 %801
        %804 = vrot.lane.b32.xlu0 %v788, 120
        %v805 = vpop.permute.xlu0 %804
        %807 = vrot.lane.b32.xlu0 %v788, 112
        %v808 = vpop.permute.xlu0 %807
        %810 = vrot.lane.b32.xlu0 %v788, 104
        %v811 = vpop.permute.xlu0 %810
        %vm813 = vcmask 64512
        %v815 = vsel %vm813, %v786, 0
        %v818 = vsel %vm813, %v787, 0
        %820 = vmatprep.subr.bf16.mxu0 0
        %821 = vmatpush1.bf16.xpose.msra.mxu0 %v818
        %822 = vmatprep.subr.bf16.mxu0 0
        %823 = vmatpush1.bf16.xpose.msra.mxu0 0
        %824 = vmatprep.subr.bf16.mxu0 0
        %825 = vmatpush1.bf16.xpose.msra.mxu0 0
        %826 = vmatprep.subr.bf16.mxu0 0
        %827 = vmatpush1.bf16.xpose.msra.mxu0 0
        %828 = vmatprep.subr.bf16.mxu0 0
        %829 = vmatpush1.bf16.xpose.msra.mxu0 0
        %830 = vmatprep.subr.bf16.mxu0 0
        %831 = vmatpush1.bf16.xpose.msra.mxu0 0
        %832 = vmatprep.subr.bf16.mxu0 0
        %833 = vmatpush1.bf16.xpose.msra.mxu0 0
        %834 = vmatprep.subr.bf16.mxu0 0
        %835 = vmatpush1.bf16.xpose.msra.mxu0 0
        %836 = vmatprep.subr.bf16.mxu0 0
        %837 = vmatpush1.bf16.xpose.msra.mxu0 0
        %838 = vmatprep.subr.bf16.mxu0 0
        %839 = vmatpush1.bf16.xpose.msra.mxu0 0
        %840 = vmatprep.subr.bf16.mxu0 0
        %841 = vmatpush1.bf16.xpose.msra.mxu0 0
        %842 = vmatprep.subr.bf16.mxu0 0
        %843 = vmatpush1.bf16.xpose.msra.mxu0 0
        %844 = vmatprep.subr.bf16.mxu0 0
        %845 = vmatpush1.bf16.xpose.msra.mxu0 0
        %846 = vmatprep.subr.bf16.mxu0 0
        %847 = vmatpush1.bf16.xpose.msra.mxu0 0
        %848 = vmatprep.subr.bf16.mxu0 0
        %849 = vmatpush1.bf16.xpose.msra.mxu0 0
        %850 = vmatprep.subr.bf16.mxu0 0
        %851 = vmatpush1.bf16.xpose.msra.mxu0 0
        %852 = vmatprep.mubr.bf16.mxu0 0
        %853 = vmatmul.mubr.bf16.gmra.mrb[0].mxu0 %v815
        %v854 = vpop.f32.mrb[0].mxu0
        %v855 = vadd.f32 0.0, %v854
        %v856 = vpop.f32.mrb[0].mxu0
        %v857 = vpop.f32.mrb[0].mxu0
        %v858 = vadd.f32 0.0, %v857
        %v859 = vpop.f32.mrb[0].mxu0
        %860 = vdwg.mxu0
        %v862 = vsel %vm813, %v791, 0
        %v865 = vsel %vm813, %v798, 0
        %867 = vmatprep.subr.bf16.mxu0 0
        %868 = vmatpush1.bf16.xpose.msra.mxu0 %v865
        %869 = vmatprep.subr.bf16.mxu0 0
        %870 = vmatpush1.bf16.xpose.msra.mxu0 0
        %871 = vmatprep.subr.bf16.mxu0 0
        %872 = vmatpush1.bf16.xpose.msra.mxu0 0
        %873 = vmatprep.subr.bf16.mxu0 0
        %874 = vmatpush1.bf16.xpose.msra.mxu0 0
        %875 = vmatprep.subr.bf16.mxu0 0
        %876 = vmatpush1.bf16.xpose.msra.mxu0 0
        %877 = vmatprep.subr.bf16.mxu0 0
        %878 = vmatpush1.bf16.xpose.msra.mxu0 0
        %879 = vmatprep.subr.bf16.mxu0 0
        %880 = vmatpush1.bf16.xpose.msra.mxu0 0
        %881 = vmatprep.subr.bf16.mxu0 0
        %882 = vmatpush1.bf16.xpose.msra.mxu0 0
        %883 = vmatprep.subr.bf16.mxu0 0
        %884 = vmatpush1.bf16.xpose.msra.mxu0 0
        %885 = vmatprep.subr.bf16.mxu0 0
        %886 = vmatpush1.bf16.xpose.msra.mxu0 0
        %887 = vmatprep.subr.bf16.mxu0 0
        %888 = vmatpush1.bf16.xpose.msra.mxu0 0
        %889 = vmatprep.subr.bf16.mxu0 0
        %890 = vmatpush1.bf16.xpose.msra.mxu0 0
        %891 = vmatprep.subr.bf16.mxu0 0
        %892 = vmatpush1.bf16.xpose.msra.mxu0 0
        %893 = vmatprep.subr.bf16.mxu0 0
        %894 = vmatpush1.bf16.xpose.msra.mxu0 0
        %895 = vmatprep.subr.bf16.mxu0 0
        %896 = vmatpush1.bf16.xpose.msra.mxu0 0
        %897 = vmatprep.subr.bf16.mxu0 0
        %898 = vmatpush1.bf16.xpose.msra.mxu0 0
        %899 = vmatprep.mubr.bf16.mxu0 0
        %900 = vmatmul.mubr.bf16.gmra.mrb[0].mxu0 %v862
        %v901 = vpop.f32.mrb[0].mxu0
        %v902 = vadd.f32 0.0, %v901
        %v903 = vpop.f32.mrb[0].mxu0
        %v904 = vpop.f32.mrb[0].mxu0
        %v905 = vadd.f32 0.0, %v904
        %v906 = vpop.f32.mrb[0].mxu0
        %907 = vdwg.mxu0
        %v909 = vsel %vm813, %v793, 0
        %v912 = vsel %vm813, %v800, 0
        %914 = vmatprep.subr.bf16.mxu0 0
        %915 = vmatpush1.bf16.xpose.msra.mxu0 %v912
        %916 = vmatprep.subr.bf16.mxu0 0
        %917 = vmatpush1.bf16.xpose.msra.mxu0 0
        %918 = vmatprep.subr.bf16.mxu0 0
        %919 = vmatpush1.bf16.xpose.msra.mxu0 0
        %920 = vmatprep.subr.bf16.mxu0 0
        %921 = vmatpush1.bf16.xpose.msra.mxu0 0
        %922 = vmatprep.subr.bf16.mxu0 0
        %923 = vmatpush1.bf16.xpose.msra.mxu0 0
        %924 = vmatprep.subr.bf16.mxu0 0
        %925 = vmatpush1.bf16.xpose.msra.mxu0 0
        %926 = vmatprep.subr.bf16.mxu0 0
        %927 = vmatpush1.bf16.xpose.msra.mxu0 0
        %928 = vmatprep.subr.bf16.mxu0 0
        %929 = vmatpush1.bf16.xpose.msra.mxu0 0
        %930 = vmatprep.subr.bf16.mxu0 0
        %931 = vmatpush1.bf16.xpose.msra.mxu0 0
        %932 = vmatprep.subr.bf16.mxu0 0
        %933 = vmatpush1.bf16.xpose.msra.mxu0 0
        %934 = vmatprep.subr.bf16.mxu0 0
        %935 = vmatpush1.bf16.xpose.msra.mxu0 0
        %936 = vmatprep.subr.bf16.mxu0 0
        %937 = vmatpush1.bf16.xpose.msra.mxu0 0
        %938 = vmatprep.subr.bf16.mxu0 0
        %939 = vmatpush1.bf16.xpose.msra.mxu0 0
        %940 = vmatprep.subr.bf16.mxu0 0
        %941 = vmatpush1.bf16.xpose.msra.mxu0 0
        %942 = vmatprep.subr.bf16.mxu0 0
        %943 = vmatpush1.bf16.xpose.msra.mxu0 0
        %944 = vmatprep.subr.bf16.mxu0 0
        %945 = vmatpush1.bf16.xpose.msra.mxu0 0
        %946 = vmatprep.mubr.bf16.mxu0 0
        %947 = vmatmul.mubr.bf16.gmra.mrb[0].mxu0 %v909
        %v948 = vpop.f32.mrb[0].mxu0
        %v949 = vadd.f32 0.0, %v948
        %v950 = vpop.f32.mrb[0].mxu0
        %v951 = vpop.f32.mrb[0].mxu0
        %v952 = vadd.f32 0.0, %v951
        %v953 = vpop.f32.mrb[0].mxu0
        %954 = vdwg.mxu0
        %v956 = vsel %vm813, %v795, 0
        %v959 = vsel %vm813, %v802, 0
        %961 = vmatprep.subr.bf16.mxu0 0
        %962 = vmatpush1.bf16.xpose.msra.mxu0 %v959
        %963 = vmatprep.subr.bf16.mxu0 0
        %964 = vmatpush1.bf16.xpose.msra.mxu0 0
        %965 = vmatprep.subr.bf16.mxu0 0
        %966 = vmatpush1.bf16.xpose.msra.mxu0 0
        %967 = vmatprep.subr.bf16.mxu0 0
        %968 = vmatpush1.bf16.xpose.msra.mxu0 0
        %969 = vmatprep.subr.bf16.mxu0 0
        %970 = vmatpush1.bf16.xpose.msra.mxu0 0
        %971 = vmatprep.subr.bf16.mxu0 0
        %972 = vmatpush1.bf16.xpose.msra.mxu0 0
        %973 = vmatprep.subr.bf16.mxu0 0
        %974 = vmatpush1.bf16.xpose.msra.mxu0 0
        %975 = vmatprep.subr.bf16.mxu0 0
        %976 = vmatpush1.bf16.xpose.msra.mxu0 0
        %977 = vmatprep.subr.bf16.mxu0 0
        %978 = vmatpush1.bf16.xpose.msra.mxu0 0
        %979 = vmatprep.subr.bf16.mxu0 0
        %980 = vmatpush1.bf16.xpose.msra.mxu0 0
        %981 = vmatprep.subr.bf16.mxu0 0
        %982 = vmatpush1.bf16.xpose.msra.mxu0 0
        %983 = vmatprep.subr.bf16.mxu0 0
        %984 = vmatpush1.bf16.xpose.msra.mxu0 0
        %985 = vmatprep.subr.bf16.mxu0 0
        %986 = vmatpush1.bf16.xpose.msra.mxu0 0
        %987 = vmatprep.subr.bf16.mxu0 0
        %988 = vmatpush1.bf16.xpose.msra.mxu0 0
        %989 = vmatprep.subr.bf16.mxu0 0
        %990 = vmatpush1.bf16.xpose.msra.mxu0 0
        %991 = vmatprep.subr.bf16.mxu0 0
        %992 = vmatpush1.bf16.xpose.msra.mxu0 0
        %993 = vmatprep.mubr.bf16.mxu0 0
        %994 = vmatmul.mubr.bf16.gmra.mrb[0].mxu0 %v956
        %v995 = vpop.f32.mrb[0].mxu0
        %v996 = vadd.f32 0.0, %v995
        %v997 = vpop.f32.mrb[0].mxu0
        %v998 = vpop.f32.mrb[0].mxu0
        %v999 = vadd.f32 0.0, %v998
        %v1000 = vpop.f32.mrb[0].mxu0
        %1001 = vdwg.mxu0
        %vm1002 = vcmask 130048
        %v1003 = vsel %vm1002, %v855, -inf
        %1004 = vmax.xlane.f32.xlu0 %v1003
        %v1005 = vpop.xlane.xlu0 %1004
        %v1006 = vsel %vm1002, %v858, -inf
        %1007 = vmax.xlane.f32.xlu0 %v1006
        %v1008 = vpop.xlane.xlu0 %1007
        %v1009 = vsel %vm1002, %v902, -inf
        %1010 = vmax.xlane.f32.xlu0 %v1009
        %v1011 = vpop.xlane.xlu0 %1010
        %v1012 = vsel %vm1002, %v905, -inf
        %1013 = vmax.xlane.f32.xlu0 %v1012
        %v1014 = vpop.xlane.xlu0 %1013
        %v1015 = vsel %vm1002, %v949, -inf
        %1016 = vmax.xlane.f32.xlu0 %v1015
        %v1017 = vpop.xlane.xlu0 %1016
        %v1018 = vsel %vm1002, %v952, -inf
        %1019 = vmax.xlane.f32.xlu0 %v1018
        %v1020 = vpop.xlane.xlu0 %1019
        %v1021 = vsel %vm1002, %v996, -inf
        %1022 = vmax.xlane.f32.xlu0 %v1021
        %v1023 = vpop.xlane.xlu0 %1022
        %v1024 = vsel %vm1002, %v999, -inf
        %1025 = vmax.xlane.f32.xlu0 %v1024
        %v1026 = vpop.xlane.xlu0 %1025
        %v1027 = vsub.f32 %v855, %v1005
        %v1028 = vsub.f32 %v858, %v1008
        %v1029 = vsub.f32 %v902, %v1011
        %v1030 = vsub.f32 %v905, %v1014
        %v1031 = vsub.f32 %v949, %v1017
        %v1032 = vsub.f32 %v952, %v1020
        %v1033 = vsub.f32 %v996, %v1023
        %v1034 = vsub.f32 %v999, %v1026
        %v1035 = vmul.f32 %v1027, 1.442695
        %v1036 = vpow.pop %v1035
        %v1037 = vmul.f32 %v1028, 1.442695
        %v1038 = vpow.pop %v1037
        %v1039 = vmul.f32 %v1029, 1.442695
        %v1040 = vpow.pop %v1039
        %v1041 = vmul.f32 %v1030, 1.442695
        %v1042 = vpow.pop %v1041
        %v1043 = vmul.f32 %v1031, 1.442695
        %v1044 = vpow.pop %v1043
        %v1045 = vmul.f32 %v1032, 1.442695
        %v1046 = vpow.pop %v1045
        %v1047 = vmul.f32 %v1033, 1.442695
        %v1048 = vpow.pop %v1047
        %v1049 = vmul.f32 %v1034, 1.442695
        %v1050 = vpow.pop %v1049
        %v1051 = vsel %vm1002, %v1036, 0.0
        %1052 = vadd.xlane.f32.xlu0 %v1051
        %v1053 = vpop.xlane.xlu0 %1052
        %v1054 = vsel %vm1002, %v1038, 0.0
        %1055 = vadd.xlane.f32.xlu0 %v1054
        %v1056 = vpop.xlane.xlu0 %1055
        %v1057 = vsel %vm1002, %v1040, 0.0
        %1058 = vadd.xlane.f32.xlu0 %v1057
        %v1059 = vpop.xlane.xlu0 %1058
        %v1060 = vsel %vm1002, %v1042, 0.0
        %1061 = vadd.xlane.f32.xlu0 %v1060
        %v1062 = vpop.xlane.xlu0 %1061
        %v1063 = vsel %vm1002, %v1044, 0.0
        %1064 = vadd.xlane.f32.xlu0 %v1063
        %v1065 = vpop.xlane.xlu0 %1064
        %v1066 = vsel %vm1002, %v1046, 0.0
        %1067 = vadd.xlane.f32.xlu0 %v1066
        %v1068 = vpop.xlane.xlu0 %1067
        %v1069 = vsel %vm1002, %v1048, 0.0
        %1070 = vadd.xlane.f32.xlu0 %v1069
        %v1071 = vpop.xlane.xlu0 %1070
        %v1072 = vsel %vm1002, %v1050, 0.0
        %1073 = vadd.xlane.f32.xlu0 %v1072
        %v1074 = vpop.xlane.xlu0 %1073
        %v1075 = vpack.c.bf16 %v1038, %v1036
        %v1076 = vpack.c.bf16 %v1042, %v1040
        %v1077 = vpack.c.bf16 %v1046, %v1044
        %v1078 = vpack.c.bf16 %v1050, %v1048
        %v1080 = vsel %vm1002, %v1075, 0
        %1082 = vmatprep.subr.bf16.mxu0 0
        %1083 = vmatpush1.bf16.msra.mxu0 %v788
        %1084 = vmatprep.subr.bf16.mxu0 0
        %1085 = vmatpush1.bf16.msra.mxu0 0
        %1086 = vmatprep.subr.bf16.mxu0 0
        %1087 = vmatpush1.bf16.msra.mxu0 0
        %1088 = vmatprep.subr.bf16.mxu0 0
        %1089 = vmatpush1.bf16.msra.mxu0 0
        %1090 = vmatprep.subr.bf16.mxu0 0
        %1091 = vmatpush1.bf16.msra.mxu0 0
        %1092 = vmatprep.subr.bf16.mxu0 0
        %1093 = vmatpush1.bf16.msra.mxu0 0
        %1094 = vmatprep.subr.bf16.mxu0 0
        %1095 = vmatpush1.bf16.msra.mxu0 0
        %1096 = vmatprep.subr.bf16.mxu0 0
        %1097 = vmatpush1.bf16.msra.mxu0 0
        %1098 = vmatprep.subr.bf16.mxu0 0
        %1099 = vmatpush1.bf16.msra.mxu0 0
        %1100 = vmatprep.subr.bf16.mxu0 0
        %1101 = vmatpush1.bf16.msra.mxu0 0
        %1102 = vmatprep.subr.bf16.mxu0 0
        %1103 = vmatpush1.bf16.msra.mxu0 0
        %1104 = vmatprep.subr.bf16.mxu0 0
        %1105 = vmatpush1.bf16.msra.mxu0 0
        %1106 = vmatprep.subr.bf16.mxu0 0
        %1107 = vmatpush1.bf16.msra.mxu0 0
        %1108 = vmatprep.subr.bf16.mxu0 0
        %1109 = vmatpush1.bf16.msra.mxu0 0
        %1110 = vmatprep.subr.bf16.mxu0 0
        %1111 = vmatpush1.bf16.msra.mxu0 0
        %1112 = vmatprep.subr.bf16.mxu0 0
        %1113 = vmatpush1.bf16.msra.mxu0 0
        %1114 = vmatprep.mubr.bf16.mxu0 0
        %1115 = vmatmul.mubr.bf16.gmra.mrb[0].mxu0 %v1080
        %v1116 = vpop.f32.mrb[0].mxu0
        %v1117 = vadd.f32 0.0, %v1116
        %v1118 = vpop.f32.mrb[0].mxu0
        %v1119 = vpop.f32.mrb[0].mxu0
        %v1120 = vadd.f32 0.0, %v1119
        %v1121 = vpop.f32.mrb[0].mxu0
        %1122 = vdwg.mxu0
        %v1124 = vsel %vm1002, %v1076, 0
        %1126 = vmatprep.subr.bf16.mxu0 0
        %1127 = vmatpush1.bf16.msra.mxu0 %v805
        %1128 = vmatprep.subr.bf16.mxu0 0
        %1129 = vmatpush1.bf16.msra.mxu0 0
        %1130 = vmatprep.subr.bf16.mxu0 0
        %1131 = vmatpush1.bf16.msra.mxu0 0
        %1132 = vmatprep.subr.bf16.mxu0 0
        %1133 = vmatpush1.bf16.msra.mxu0 0
        %1134 = vmatprep.subr.bf16.mxu0 0
        %1135 = vmatpush1.bf16.msra.mxu0 0
        %1136 = vmatprep.subr.bf16.mxu0 0
        %1137 = vmatpush1.bf16.msra.mxu0 0
        %1138 = vmatprep.subr.bf16.mxu0 0
        %1139 = vmatpush1.bf16.msra.mxu0 0
        %1140 = vmatprep.subr.bf16.mxu0 0
        %1141 = vmatpush1.bf16.msra.mxu0 0
        %1142 = vmatprep.subr.bf16.mxu0 0
        %1143 = vmatpush1.bf16.msra.mxu0 0
        %1144 = vmatprep.subr.bf16.mxu0 0
        %1145 = vmatpush1.bf16.msra.mxu0 0
        %1146 = vmatprep.subr.bf16.mxu0 0
        %1147 = vmatpush1.bf16.msra.mxu0 0
        %1148 = vmatprep.subr.bf16.mxu0 0
        %1149 = vmatpush1.bf16.msra.mxu0 0
        %1150 = vmatprep.subr.bf16.mxu0 0
        %1151 = vmatpush1.bf16.msra.mxu0 0
        %1152 = vmatprep.subr.bf16.mxu0 0
        %1153 = vmatpush1.bf16.msra.mxu0 0
        %1154 = vmatprep.subr.bf16.mxu0 0
        %1155 = vmatpush1.bf16.msra.mxu0 0
        %1156 = vmatprep.subr.bf16.mxu0 0
        %1157 = vmatpush1.bf16.msra.mxu0 0
        %1158 = vmatprep.mubr.bf16.mxu0 0
        %1159 = vmatmul.mubr.bf16.gmra.mrb[0].mxu0 %v1124
        %v1160 = vpop.f32.mrb[0].mxu0
        %v1161 = vadd.f32 0.0, %v1160
        %v1162 = vpop.f32.mrb[0].mxu0
        %v1163 = vpop.f32.mrb[0].mxu0
        %v1164 = vadd.f32 0.0, %v1163
        %v1165 = vpop.f32.mrb[0].mxu0
        %1166 = vdwg.mxu0
        %v1168 = vsel %vm1002, %v1077, 0
        %1170 = vmatprep.subr.bf16.mxu0 0
        %1171 = vmatpush1.bf16.msra.mxu0 %v808
        %1172 = vmatprep.subr.bf16.mxu0 0
        %1173 = vmatpush1.bf16.msra.mxu0 0
        %1174 = vmatprep.subr.bf16.mxu0 0
        %1175 = vmatpush1.bf16.msra.mxu0 0
        %1176 = vmatprep.subr.bf16.mxu0 0
        %1177 = vmatpush1.bf16.msra.mxu0 0
        %1178 = vmatprep.subr.bf16.mxu0 0
        %1179 = vmatpush1.bf16.msra.mxu0 0
        %1180 = vmatprep.subr.bf16.mxu0 0
        %1181 = vmatpush1.bf16.msra.mxu0 0
        %1182 = vmatprep.subr.bf16.mxu0 0
        %1183 = vmatpush1.bf16.msra.mxu0 0
        %1184 = vmatprep.subr.bf16.mxu0 0
        %1185 = vmatpush1.bf16.msra.mxu0 0
        %1186 = vmatprep.subr.bf16.mxu0 0
        %1187 = vmatpush1.bf16.msra.mxu0 0
        %1188 = vmatprep.subr.bf16.mxu0 0
        %1189 = vmatpush1.bf16.msra.mxu0 0
        %1190 = vmatprep.subr.bf16.mxu0 0
        %1191 = vmatpush1.bf16.msra.mxu0 0
        %1192 = vmatprep.subr.bf16.mxu0 0
        %1193 = vmatpush1.bf16.msra.mxu0 0
        %1194 = vmatprep.subr.bf16.mxu0 0
        %1195 = vmatpush1.bf16.msra.mxu0 0
        %1196 = vmatprep.subr.bf16.mxu0 0
        %1197 = vmatpush1.bf16.msra.mxu0 0
        %1198 = vmatprep.subr.bf16.mxu0 0
        %1199 = vmatpush1.bf16.msra.mxu0 0
        %1200 = vmatprep.subr.bf16.mxu0 0
        %1201 = vmatpush1.bf16.msra.mxu0 0
        %1202 = vmatprep.mubr.bf16.mxu0 0
        %1203 = vmatmul.mubr.bf16.gmra.mrb[0].mxu0 %v1168
        %v1204 = vpop.f32.mrb[0].mxu0
        %v1205 = vadd.f32 0.0, %v1204
        %v1206 = vpop.f32.mrb[0].mxu0
        %v1207 = vpop.f32.mrb[0].mxu0
        %v1208 = vadd.f32 0.0, %v1207
        %v1209 = vpop.f32.mrb[0].mxu0
        %1210 = vdwg.mxu0
        %v1212 = vsel %vm1002, %v1078, 0
        %1214 = vmatprep.subr.bf16.mxu0 0
        %1215 = vmatpush1.bf16.msra.mxu0 %v811
        %1216 = vmatprep.subr.bf16.mxu0 0
        %1217 = vmatpush1.bf16.msra.mxu0 0
        %1218 = vmatprep.subr.bf16.mxu0 0
        %1219 = vmatpush1.bf16.msra.mxu0 0
        %1220 = vmatprep.subr.bf16.mxu0 0
        %1221 = vmatpush1.bf16.msra.mxu0 0
        %1222 = vmatprep.subr.bf16.mxu0 0
        %1223 = vmatpush1.bf16.msra.mxu0 0
        %1224 = vmatprep.subr.bf16.mxu0 0
        %1225 = vmatpush1.bf16.msra.mxu0 0
        %1226 = vmatprep.subr.bf16.mxu0 0
        %1227 = vmatpush1.bf16.msra.mxu0 0
        %1228 = vmatprep.subr.bf16.mxu0 0
        %1229 = vmatpush1.bf16.msra.mxu0 0
        %1230 = vmatprep.subr.bf16.mxu0 0
        %1231 = vmatpush1.bf16.msra.mxu0 0
        %1232 = vmatprep.subr.bf16.mxu0 0
        %1233 = vmatpush1.bf16.msra.mxu0 0
        %1234 = vmatprep.subr.bf16.mxu0 0
        %1235 = vmatpush1.bf16.msra.mxu0 0
        %1236 = vmatprep.subr.bf16.mxu0 0
        %1237 = vmatpush1.bf16.msra.mxu0 0
        %1238 = vmatprep.subr.bf16.mxu0 0
        %1239 = vmatpush1.bf16.msra.mxu0 0
        %1240 = vmatprep.subr.bf16.mxu0 0
        %1241 = vmatpush1.bf16.msra.mxu0 0
        %1242 = vmatprep.subr.bf16.mxu0 0
        %1243 = vmatpush1.bf16.msra.mxu0 0
        %1244 = vmatprep.subr.bf16.mxu0 0
        %1245 = vmatpush1.bf16.msra.mxu0 0
        %1246 = vmatprep.mubr.bf16.mxu0 0
        %1247 = vmatmul.mubr.bf16.gmra.mrb[0].mxu0 %v1212
        %v1248 = vpop.f32.mrb[0].mxu0
        %v1249 = vadd.f32 0.0, %v1248
        %v1250 = vpop.f32.mrb[0].mxu0
        %v1251 = vpop.f32.mrb[0].mxu0
        %v1252 = vadd.f32 0.0, %v1251
        %v1253 = vpop.f32.mrb[0].mxu0
        %1254 = vdwg.mxu0
        %v1255 = vrcp.pop %v1053
        %v1256 = vmul.f32 1.0, %v1255
        %v1257 = vrcp.pop %v1056
        %v1258 = vmul.f32 1.0, %v1257
        %v1259 = vrcp.pop %v1059
        %v1260 = vmul.f32 1.0, %v1259
        %v1261 = vrcp.pop %v1062
        %v1262 = vmul.f32 1.0, %v1261
        %v1263 = vrcp.pop %v1065
        %v1264 = vmul.f32 1.0, %v1263
        %v1265 = vrcp.pop %v1068
        %v1266 = vmul.f32 1.0, %v1265
        %v1267 = vrcp.pop %v1071
        %v1268 = vmul.f32 1.0, %v1267
        %v1269 = vrcp.pop %v1074
        %v1270 = vmul.f32 1.0, %v1269
        %v1271 = vmul.f32 %v1117, %v1256
        %v1272 = vmul.f32 %v1120, %v1258
        %v1273 = vmul.f32 %v1161, %v1260
        %v1274 = vmul.f32 %v1164, %v1262
        %v1275 = vmul.f32 %v1205, %v1264
        %v1276 = vmul.f32 %v1208, %v1266
        %v1277 = vmul.f32 %v1249, %v1268
        %v1278 = vmul.f32 %v1252, %v1270
        %1281 = vrot.lane.b32.xlu0 %v1273, 8
        %v1282 = vpop.permute.xlu0 %1281
        %1283 = vrot.lane.b32.xlu0 %v1274, 8
        %v1284 = vpop.permute.xlu0 %1283
        %1289 = vrot.lane.b32.xlu0 %v1275, 16
        %v1290 = vpop.permute.xlu0 %1289
        %1291 = vrot.lane.b32.xlu0 %v1276, 16
        %v1292 = vpop.permute.xlu0 %1291
        %1297 = vrot.lane.b32.xlu0 %v1277, 24
        %v1298 = vpop.permute.xlu0 %1297
        %1299 = vrot.lane.b32.xlu0 %v1278, 24
        %v1300 = vpop.permute.xlu0 %1299
        %v1303 = vsel %vm813, %v1271, %v1282
        %v1304 = vsel %vm813, %v1272, %v1284
        %v1305 = vsel %vm1002, %v1303, %v1290
        %v1306 = vsel %vm1002, %v1304, %v1292
        %vm1307 = vcmask 195584
        %v1308 = vsel %vm1307, %v1305, %v1298
        %v1309 = vsel %vm1307, %v1306, %v1300
        %v1310 = vpack.c.bf16 %v1309, %v1308
        %v1311 = vld [vmem:[%s9] sm:$0xf]
        %v1312 = vld [vmem:[%s9 + $0x4] sm:$0xf]
        %v1313 = vld [vmem:[%s9 + $0x8] sm:$0xf]
        %v1314 = vld [vmem:[%s9 + $0xc] sm:$0xf]
        %v1315 = vld [vmem:[%s10] sm:$0x1]
        %v1317 = vlaneseq
        %v1318 = vshrl.u32 %v1317, 7
        %v1319 = vsub.s32 0, %v1318
        %v1320 = vrot.slane %v1315, %v1319
        %v1326 = vunpack.c.l.b16 %v1311
        %v1327 = vunpack.c.l.b16 %v1312
        %v1328 = vunpack.c.l.b16 %v1313
        %v1329 = vunpack.c.l.b16 %v1314
        %v1330 = vpack.c.b16 %v1327, %v1326
        %v1331 = vpack.c.b16 %v1329, %v1328
        %v1335 = vsel %vm597, %v1310, 0
        %1337 = vmatprep.subr.bf16.mxu0 0
        %1338 = vmatpush1.bf16.msra.mxu0 %v1330
        %1339 = vmatprep.subr.bf16.mxu0 0
        %1340 = vmatpush1.bf16.msra.mxu0 %v1331
        %1341 = vmatprep.subr.bf16.mxu0 0
        %1342 = vmatpush1.bf16.msra.mxu0 0
        %1343 = vmatprep.subr.bf16.mxu0 0
        %1344 = vmatpush1.bf16.msra.mxu0 0
        %1345 = vmatprep.subr.bf16.mxu0 0
        %1346 = vmatpush1.bf16.msra.mxu0 0
        %1347 = vmatprep.subr.bf16.mxu0 0
        %1348 = vmatpush1.bf16.msra.mxu0 0
        %1349 = vmatprep.subr.bf16.mxu0 0
        %1350 = vmatpush1.bf16.msra.mxu0 0
        %1351 = vmatprep.subr.bf16.mxu0 0
        %1352 = vmatpush1.bf16.msra.mxu0 0
        %1353 = vmatprep.subr.bf16.mxu0 0
        %1354 = vmatpush1.bf16.msra.mxu0 0
        %1355 = vmatprep.subr.bf16.mxu0 0
        %1356 = vmatpush1.bf16.msra.mxu0 0
        %1357 = vmatprep.subr.bf16.mxu0 0
        %1358 = vmatpush1.bf16.msra.mxu0 0
        %1359 = vmatprep.subr.bf16.mxu0 0
        %1360 = vmatpush1.bf16.msra.mxu0 0
        %1361 = vmatprep.subr.bf16.mxu0 0
        %1362 = vmatpush1.bf16.msra.mxu0 0
        %1363 = vmatprep.subr.bf16.mxu0 0
        %1364 = vmatpush1.bf16.msra.mxu0 0
        %1365 = vmatprep.subr.bf16.mxu0 0
        %1366 = vmatpush1.bf16.msra.mxu0 0
        %1367 = vmatprep.subr.bf16.mxu0 0
        %1368 = vmatpush1.bf16.msra.mxu0 0
        %1369 = vmatprep.mubr.bf16.mxu0 0
        %1370 = vmatmul.mubr.bf16.gmra.mrb[0].mxu0 %v1335
        %v1371 = vpop.f32.mrb[0].mxu0
        %v1372 = vadd.f32 %v1320, %v1371
        %v1373 = vpop.f32.mrb[0].mxu0
        %v1374 = vpop.f32.mrb[0].mxu0
        %v1375 = vadd.f32 %v1320, %v1374
        %v1376 = vpop.f32.mrb[0].mxu0
        %1377 = vdwg.mxu0
        %v1378 = vpack.c.bf16 %v1375, %v1372
        %v1380 = vunpack.c.l.b16 %v1378
        %v1381 = vunpack.c.h.b16 %v1378
        %v1382 = vpack.c.b16 %v1380, %v1380
        %v1383 = vpack.c.b16 %v1381, %v1381
        %vm1386 = vcmask 257024
        %1387 = vst.msk [vmem:[%s554] sm:$0xf] %vm1386, %v1382
        %1388 = vst.msk [vmem:[%s554 + $0x4] sm:$0xf] %vm1386, %v1383
        %v1389 = vmul.f32 %v1036, %v1256
        %v1390 = vmul.f32 %v1038, %v1258
        %v1391 = vmul.f32 %v1040, %v1260
        %v1392 = vmul.f32 %v1042, %v1262
        %v1393 = vmul.f32 %v1044, %v1264
        %v1394 = vmul.f32 %v1046, %v1266
        %v1395 = vmul.f32 %v1048, %v1268
        %v1396 = vmul.f32 %v1050, %v1270
        %v1397 = vsel %vm1002, %v1389, 0.0
        %v1398 = vsel %vm1002, %v1391, 0.0
        %v1399 = vadd.f32 %v1397, %v1398
        %v1400 = vsel %vm1002, %v1393, 0.0
        %v1401 = vadd.f32 %v1399, %v1400
        %v1402 = vsel %vm1002, %v1395, 0.0
        %v1403 = vadd.f32 %v1401, %v1402
        %v1404 = vsel %vm1002, %v1390, 0.0
        %v1405 = vsel %vm1002, %v1392, 0.0
        %v1406 = vadd.f32 %v1404, %v1405
        %v1407 = vsel %vm1002, %v1394, 0.0
        %v1408 = vadd.f32 %v1406, %v1407
        %v1409 = vsel %vm1002, %v1396, 0.0
        %v1410 = vadd.f32 %v1408, %v1409
        %v1411 = vrcp.pop 4.0
        %v1412 = vmul.f32 %v1403, %v1411
        %v1413 = vmul.f32 %v1410, %v1411
        %v1414 = vpack.c.bf16 %v1413, %v1412
        %v1416 = vunpack.c.l.b16 %v1414
        %v1417 = vunpack.c.h.b16 %v1414
        %v1418 = vpack.c.b16 %v1416, %v1416
        %v1419 = vpack.c.b16 %v1417, %v1417
        %vm1422 = vcmask 125952
        %1423 = vst.msk [vmem:[%s561] sm:$0xf] %vm1422, %v1418
        %1424 = vst.msk [vmem:[%s561 + $0x4] sm:$0xf] %vm1422, %v1419
        %s1425 = sand.u32 %s292, 1
        %s1426 = scalar_lea.sflag [#allocation4], %s1425
        %s1427 = sand.u32 %s292, 1
        %s1428 = smul.addr %s1427, 8
        %s1429 = scalar_lea.vmem [#allocation13], %s1428
        %s1430 = sand.u32 %s318, 1
        %s1431 = scalar_lea.sflag [#allocation15], %s1430
        %s1432 = sand.u32 %s318, 1
        %s1433 = smul.addr %s1432, 8
        %s1434 = scalar_lea.vmem [#allocation14], %s1433
        // Predicated region
        $region89: #{tpu_custom_call.1} parent=63 // pred_check
          %p1435 = pneg %p302
        $region90: #{tpu_custom_call.1} parent=63 // pred_check_branch
          %1437 = sbr.rel (%p1435) target = $region92
        $region91: #{tpu_custom_call.1} parent=63 // pred_region
          %s1439 = ssub.s32 128, 128
          %1440 = vsyncadd %s1426, %s1439
          %s1441 = smul.addr %s38, 2
          %s1442 = smul.addr %s1441, 64
          %s1443 = scalar_lea.hbm %s11, %s1442
          %s1444 = sshll.u32 %s1429, 4
          %s1445 = int_to_ptr.vmem [resolvable:$true] %s1444
          %1450 = dma.vmem_to_hbm [thread:$0]  %s1445, 128, %s1443, %s1426, 64, 64, 4
        $region92: #{tpu_custom_call.1} parent=63 // pred_fallthru
          _
        // Predicated region
        $region93: #{tpu_custom_call.1} parent=63 // pred_check
          %p1451 = pneg %p328
        $region94: #{tpu_custom_call.1} parent=63 // pred_check_branch
          %1453 = sbr.rel (%p1451) target = $region96
        $region95: #{tpu_custom_call.1} parent=63 // pred_region
          %s1455 = ssub.s32 128, 128
          %1456 = vsyncadd %s1431, %s1455
          %s1457 = smul.addr %s38, 2
          %s1458 = smul.addr %s1457, 64
          %s1459 = scalar_lea.hbm %s12, %s1458
          %s1460 = sshll.u32 %s1434, 4
          %s1461 = int_to_ptr.vmem [resolvable:$true] %s1460
          %1466 = dma.vmem_to_hbm [thread:$0]  %s1461, 128, %s1459, %s1431, 64, 64, 4
        $region96: #{tpu_custom_call.1} parent=63 // pred_fallthru
          _
      $region64: #{tpu_custom_call.1} parent=5 // pred_fallthru
        _
      %p1467 = scmp.le.s32.totalorder 2, %s33
      // Predicated region
      $region97: #{tpu_custom_call.1} parent=5 // pred_check
        %p1468 = pneg %p1467
      $region98: #{tpu_custom_call.1} parent=5 // pred_check_branch
        %1470 = sbr.rel (%p1468) target = $region100
      $region99: #{tpu_custom_call.1} parent=5 // pred_region
        %s1471 = ssub.s32 %s33, 2
        // Predicated region
        $region101: #{tpu_custom_call.1} parent=99 // pred_check
          %p1472 = pneg %p308
        $region102: #{tpu_custom_call.1} parent=99 // pred_check_branch
          %1474 = sbr.rel (%p1472) target = $region104
        $region103: #{tpu_custom_call.1} parent=99 // pred_region
          %s1475 = sand.u32 %s293, 1
          %s1476 = scalar_lea.sflag [#allocation4], %s1475
          %s1477 = sand.u32 %s293, 1
          %s1478 = smul.addr %s1477, 8
          %s1479 = scalar_lea.vmem [#allocation13], %s1478
          %1480 = dma.done %s1476, 128
        $region104: #{tpu_custom_call.1} parent=99 // pred_fallthru
          _
        // Predicated region
        $region105: #{tpu_custom_call.1} parent=99 // pred_check
          %p1481 = pneg %p334
        $region106: #{tpu_custom_call.1} parent=99 // pred_check_branch
          %1483 = sbr.rel (%p1481) target = $region108
        $region107: #{tpu_custom_call.1} parent=99 // pred_region
          %s1484 = sand.u32 %s319, 1
          %s1485 = scalar_lea.sflag [#allocation15], %s1484
          %s1486 = sand.u32 %s319, 1
          %s1487 = smul.addr %s1486, 8
          %s1488 = scalar_lea.vmem [#allocation14], %s1487
          %1489 = dma.done %s1485, 128
        $region108: #{tpu_custom_call.1} parent=99 // pred_fallthru
          _
      $region100: #{tpu_custom_call.1} parent=5 // pred_fallthru
        _
    $region6: #{tpu_custom_call.1} parent=1 // loop_footer
      %s37 = sadd.s32 1, %s33
    $region7: #{tpu_custom_call.1} parent=1 // loop_footer_branch
      %32 = sbr.rel target = $region3
    $region8: #{tpu_custom_call.1} parent=1 // loop_exit
      _
    %1490 = vsyncpa [#allocation3], 1
    %s1491 = scalar_lea.sflag [#allocation3], 1
    %1492 = vsyncpa %s1491, 1
    %1493 = vsyncpa [#allocation6], 1
    %s1494 = scalar_lea.sflag [#allocation6], 1
    %1495 = vsyncpa %s1494, 1
    %1496 = vsyncpa [#allocation9], 1
    %1497 = vsyncpa [#allocation12], 1
    %1498 = vsyncpa [#allocation4], 1
    %s1499 = scalar_lea.sflag [#allocation4], 1
    %1500 = vsyncpa %s1499, 1
    %1501 = vsyncpa [#allocation15], 1
    %s1502 = scalar_lea.sflag [#allocation15], 1
    %1503 = vsyncpa %s1502, 1

</llo_original>
